<compile_context>
chip_gen: v6e
topology: v6e:2x2x1
jax: 0.10.0
libtpu: 0.0.40
codegen_flags: <defaults>
</compile_context>

<pallas_src>
import math

import jax
import jax.numpy as jnp
from jax import lax
from jax.experimental import pallas as pl
from jax.experimental.pallas import tpu as pltpu

NHEAD = 2
LN_EPS = 1e-5
HEAD_HIDDEN = 1000   # logical fc1 width (PyTorch module)
HID_PAD = 1024       # fc1 width padded to a lane multiple
OUT_PAD = 128        # classifier output padded for a lane-dense store


# ----------------------------- Pallas kernel ------------------------------- #

def _fused_forward_kernel(x_ref, wproj_ref, wff1_ref, wff2_ref, vecs_ref,
                          wfc1_ref, wfc2_ref, hvec_ref, o_ref):
    """Entire forward pass: n_layers encoder layers + fc1/relu/fc2 head."""
    x = x_ref[...].astype(jnp.float32)              # (S, D) activation, f32
    s_len, d = x.shape
    dh = d // NHEAD
    scale = 1.0 / math.sqrt(dh)
    n_layers = wproj_ref.shape[0]
    ff = wff1_ref.shape[-1]
    inv_d = 1.0 / d
    lane = lax.broadcasted_iota(jnp.int32, (1, d), 1)

    def normalize(y):
        # Independent sum / sum-of-squares -> the two cross-lane reductions
        # can overlap; var = E[y^2] - mu^2 (drops one (y-mu) VPU pass).
        s1 = jnp.sum(y, axis=-1, keepdims=True)
        s2 = jnp.sum(y * y, axis=-1, keepdims=True)
        mu = s1 * inv_d
        var = s2 * inv_d - mu * mu
        return (y - mu) * lax.rsqrt(var + LN_EPS)

    for l in range(n_layers):                       # static unroll (2 layers)
        vl = vecs_ref[l]                             # (8, VEC_W) packed vectors
        b_proj = vl[0, :4 * d]
        b_o = vl[1, :d]
        g1 = vl[2, :d]
        be1 = vl[3, :d]
        b_ff1 = vl[4, :ff]
        b_ff2 = vl[5, :d]
        g2 = vl[6, :d]
        be2 = vl[7, :d]

        # ---- attention projection: ONE lane-dense (S,d)@(d,4d) matmul ----
        # proj = [ q | k | x@(W_v W_o)_head0 | x@(W_v W_o)_head1 ]  (+ biases)
        proj = jnp.dot(x.astype(jnp.bfloat16), wproj_ref[l],
                       preferred_element_type=jnp.float32) + b_proj
        q = proj[:, :d]
        k = proj[:, d:2 * d]
        attn = jnp.zeros((s_len, d), jnp.float32)
        for h in range(NHEAD):                      # static unroll (2 heads)
            # Constant 0/scale lane mask instead of a 16-lane sub-vreg slice:
            # masked lanes contribute zero to the d-lane contraction, so this
            # equals (q_h * scale) @ k_h^T exactly.
            m_h = jnp.where((lane >= h * dh) & (lane < (h + 1) * dh),
                            scale, 0.0)
            s = lax.dot_general(q * m_h, k, (((1,), (1,)), ((), ())),
                                preferred_element_type=jnp.float32)
            s = s - jnp.max(s, axis=-1, keepdims=True)
            p = jnp.exp(s)
            p = p * pl.reciprocal(jnp.sum(p, axis=-1, keepdims=True),
                                  approx=True)
            # W_o already folded into this slice of proj; this IS
            # (softmax @ v_h) @ W_o[h*dh:(h+1)*dh, :].
            attn = attn + jnp.dot(p, proj[:, (2 + h) * d:(3 + h) * d],
                                  preferred_element_type=jnp.float32)
        attn = attn + b_o
        # TODO(synk): dropout(p=0.1) inside the encoder layer is identity in
        # eval mode and is not modeled here.

        # ---- residual + LayerNorm1 (post-norm, PyTorch default) ----
        x = normalize(x + attn) * g1 + be1

        # ---- feed-forward: linear1 -> relu -> linear2 ----
        h1 = jnp.dot(x.astype(jnp.bfloat16), wff1_ref[l],
                     preferred_element_type=jnp.float32) + b_ff1
        h1 = jnp.maximum(h1, 0.0)
        ffo = jnp.dot(h1.astype(jnp.bfloat16), wff2_ref[l],
                      preferred_element_type=jnp.float32) + b_ff2

        # ---- residual + LayerNorm2 ----
        y = normalize(x + ffo)
        if l < n_layers - 1:
            x = y * g2 + be2
        else:
            x = y        # last layer's LN2 affine is folded into fc1

    # ---- classifier head: fc1 -> relu -> fc2 (lane-padded, lane-dense out) --
    hvec = hvec_ref[...]                             # (2, HID_PAD) packed biases
    hcls = jnp.dot(x.astype(jnp.bfloat16), wfc1_ref[...],
                   preferred_element_type=jnp.float32) + hvec[0, :]
    hcls = jnp.maximum(hcls, 0.0)
    o_ref[...] = jnp.dot(hcls.astype(jnp.bfloat16), wfc2_ref[...],
                         preferred_element_type=jnp.float32) + hvec[1, :OUT_PAD]


# ------------------------------ Wrapper ------------------------------------ #

def transformer_classifier_forward(src, packed, output_dim):
    """src: (S, input_dim) -> (S, output_dim). One fused pallas_call."""
    s_len, d = src.shape
    args = (src.astype(jnp.float32), packed["w_proj"], packed["w_ff1"],
            packed["w_ff2"], packed["vec_layer"], packed["w_fc1"],
            packed["w_fc2"], packed["vec_head"])

    # Advisory cost estimate for the XLA scheduler.
    n_layers = packed["w_proj"].shape[0]
    ff = packed["w_ff1"].shape[-1]
    flops_layer = (2 * s_len * d * 4 * d                 # packed projection
                   + NHEAD * 4 * s_len * s_len * d       # scores + P@V
                   + 4 * s_len * d * ff)                 # feed-forward
    flops = (n_layers * flops_layer
             + 2 * s_len * d * HID_PAD + 2 * s_len * HID_PAD * OUT_PAD)
    bytes_accessed = (sum(int(a.size) * a.dtype.itemsize for a in args)
                      + s_len * OUT_PAD * 4)
    cost = pl.CostEstimate(flops=int(flops),
                           transcendentals=int(n_layers * NHEAD * s_len * s_len),
                           bytes_accessed=int(bytes_accessed))

    out = pl.pallas_call(
        _fused_forward_kernel,
        out_shape=jax.ShapeDtypeStruct((s_len, OUT_PAD), jnp.float32),
        in_specs=[pl.BlockSpec(memory_space=pltpu.MemorySpace.VMEM)] * len(args),
        out_specs=pl.BlockSpec(memory_space=pltpu.MemorySpace.VMEM),
        cost_estimate=cost,
    )(*args)
    return out[:, :output_dim]


# --------------------------- Parameter init & pack -------------------------- #

def _linear(key, in_f, out_f):
    """PyTorch nn.Linear default init, in (x @ W + b) layout."""
    kw, kb = jax.random.split(key)
    bound = 1.0 / math.sqrt(in_f)
    w = jax.random.uniform(kw, (in_f, out_f), jnp.float32, -bound, bound)
    b = jax.random.uniform(kb, (out_f,), jnp.float32, -bound, bound)
    return w, b


def init_raw_params(key, input_dim, hidden_dim, output_dim, n_layers):
    """Raw f32 parameters in straightforward (x @ W + b) layout."""
    d, ff = input_dim, hidden_dim * 8
    raw = {k: [] for k in ("w_qkv", "b_qkv", "w_o", "b_o", "w_ff1", "b_ff1",
                           "w_ff2", "b_ff2", "ln1_g", "ln1_b", "ln2_g", "ln2_b")}
    for _ in range(n_layers):
        key, k_qkv, k_o, k_1, k_2 = jax.random.split(key, 5)
        w_qkv, b_qkv = _linear(k_qkv, d, 3 * d)       # in_proj
        w_o, b_o = _linear(k_o, d, d)                 # out_proj
        w1, b1 = _linear(k_1, d, ff)                  # linear1
        w2, b2 = _linear(k_2, ff, d)                  # linear2
        raw["w_qkv"].append(w_qkv); raw["b_qkv"].append(b_qkv)
        raw["w_o"].append(w_o);     raw["b_o"].append(b_o)
        raw["w_ff1"].append(w1);    raw["b_ff1"].append(b1)
        raw["w_ff2"].append(w2);    raw["b_ff2"].append(b2)
        raw["ln1_g"].append(jnp.ones((d,), jnp.float32))
        raw["ln1_b"].append(jnp.zeros((d,), jnp.float32))
        raw["ln2_g"].append(jnp.ones((d,), jnp.float32))
        raw["ln2_b"].append(jnp.zeros((d,), jnp.float32))
    key, k_fc1, k_fc2 = jax.random.split(key, 3)
    raw["w_fc1"], raw["b_fc1"] = _linear(k_fc1, hidden_dim, HEAD_HIDDEN)
    raw["w_fc2"], raw["b_fc2"] = _linear(k_fc2, HEAD_HIDDEN, output_dim)
    return raw


def pack_params(raw, input_dim, output_dim, n_layers):
    """Offline folding / packing for the kernel (mathematically equivalent)."""
    d = input_dim
    dh = d // NHEAD
    ff = raw["w_ff1"][0].shape[-1]
    vec_w = max(4 * d, ff)

    def pad1(v, w):
        return jnp.pad(v, (0, w - v.shape[0]))

    w_proj, w_ff1, w_ff2, vec_layer = [], [], [], []
    for l in range(n_layers):
        w_qkv, b_qkv = raw["w_qkv"][l], raw["b_qkv"][l]
        w_q, w_k, w_v = w_qkv[:, :d], w_qkv[:, d:2 * d], w_qkv[:, 2 * d:]
        b_q, b_k, b_v = b_qkv[:d], b_qkv[d:2 * d], b_qkv[2 * d:]
        w_o = raw["w_o"][l]
        blocks, bias_blocks = [w_q, w_k], [b_q, b_k]
        for h in range(NHEAD):
            sl = slice(h * dh, (h + 1) * dh)
            blocks.append(w_v[:, sl] @ w_o[sl, :])      # (d, d) folded V·O
            bias_blocks.append(b_v[sl] @ w_o[sl, :])    # (d,)
        w_proj.append(jnp.concatenate(blocks, axis=1))  # (d, 4d) lane-dense
        b_proj = jnp.concatenate(bias_blocks)           # (4d,)
        rows = [b_proj, raw["b_o"][l], raw["ln1_g"][l], raw["ln1_b"][l],
                raw["b_ff1"][l], raw["b_ff2"][l],
                raw["ln2_g"][l], raw["ln2_b"][l]]
        vec_layer.append(jnp.stack([pad1(r, vec_w) for r in rows]))  # (8, vec_w)
        w_ff1.append(raw["w_ff1"][l])
        w_ff2.append(raw["w_ff2"][l])

    # Fold the LAST layer's LN2 affine (gamma/beta) into fc1:
    #   (y*g + b) @ W + c  ==  y @ (diag(g) @ W) + (b @ W + c)
    g2, be2 = raw["ln2_g"][-1], raw["ln2_b"][-1]
    w_fc1 = g2[:, None] * raw["w_fc1"]
    b_fc1 = be2 @ raw["w_fc1"] + raw["b_fc1"]
    # Zero-pad to lane-aligned widths (mathematically identical to unpadded).
    w_fc1 = jnp.pad(w_fc1, ((0, 0), (0, HID_PAD - HEAD_HIDDEN)))
    b_fc1 = pad1(b_fc1, HID_PAD)
    w_fc2 = jnp.pad(raw["w_fc2"], ((0, HID_PAD - HEAD_HIDDEN),
                                   (0, OUT_PAD - output_dim)))
    b_fc2 = pad1(raw["b_fc2"], HID_PAD)      # first OUT_PAD lanes used in kernel

    return {
        "w_proj": jnp.stack(w_proj).astype(jnp.bfloat16),    # (L, d, 4d)
        "w_ff1": jnp.stack(w_ff1).astype(jnp.bfloat16),      # (L, d, ff)
        "w_ff2": jnp.stack(w_ff2).astype(jnp.bfloat16),      # (L, ff, d)
        "vec_layer": jnp.stack(vec_layer),                   # (L, 8, vec_w) f32
        "w_fc1": w_fc1.astype(jnp.bfloat16),                 # (d, HID_PAD)
        "w_fc2": w_fc2.astype(jnp.bfloat16),                 # (HID_PAD, OUT_PAD)
        "vec_head": jnp.stack([b_fc1, b_fc2]),               # (2, HID_PAD) f32
    }


# --------------------------- Pure-JAX reference ----------------------------- #

def _reference_forward(src, raw):
    """Straightforward (unfused, unpacked) forward using the raw parameters.

    Matmul weights are quantized to bf16 (as the kernel stores them) so the
    check validates the folding/packing/masking/padding logic rather than
    weight-quantization error.
    # TODO(synk): weight bf16-quantization error vs a true f32 PyTorch forward
    # is not measured here (would need a looser tolerance).
    """
    q16 = lambda w: w.astype(jnp.bfloat16).astype(jnp.float32)
    x = src.astype(jnp.float32)
    n_layers = len(raw["w_qkv"])
    d = x.shape[1]
    dh = d // NHEAD
    for l in range(n_layers):
        qkv = x @ q16(raw["w_qkv"][l]) + raw["b_qkv"][l]
        q, k, v = qkv[:, :d], qkv[:, d:2 * d], qkv[:, 2 * d:]
        heads = []
        for h in range(NHEAD):
            sl = slice(h * dh, (h + 1) * dh)
            s = (q[:, sl] / math.sqrt(dh)) @ k[:, sl].T
            heads.append(jax.nn.softmax(s, axis=-1) @ v[:, sl])
        attn = jnp.concatenate(heads, -1) @ q16(raw["w_o"][l]) + raw["b_o"][l]
        x = x + attn
        mu = x.mean(-1, keepdims=True)
        var = ((x - mu) ** 2).mean(-1, keepdims=True)
        x = (x - mu) * lax.rsqrt(var + LN_EPS) * raw["ln1_g"][l] + raw["ln1_b"][l]
        h1 = jnp.maximum(x @ q16(raw["w_ff1"][l]) + raw["b_ff1"][l], 0.0)
        x = x + h1 @ q16(raw["w_ff2"][l]) + raw["b_ff2"][l]
        mu = x.mean(-1, keepdims=True)
        var = ((x - mu) ** 2).mean(-1, keepdims=True)
        x = (x - mu) * lax.rsqrt(var + LN_EPS) * raw["ln2_g"][l] + raw["ln2_b"][l]
    h = jnp.maximum(x @ q16(raw["w_fc1"]) + raw["b_fc1"], 0.0)
    return h @ q16(raw["w_fc2"]) + raw["b_fc2"]


# --------------------------------- Main ------------------------------------ #

if __name__ == "__main__":
    SEQ, INPUT_DIM, HIDDEN_DIM, OUTPUT_DIM, N_LAYERS = 8, 32, 32, 4, 2

    key = jax.random.PRNGKey(0)
    k_src, k_params = jax.random.split(key)
    src = jax.random.normal(k_src, (SEQ, INPUT_DIM), dtype=jnp.float32)
    raw = init_raw_params(k_params, INPUT_DIM, HIDDEN_DIM, OUTPUT_DIM, N_LAYERS)
    packed = pack_params(raw, INPUT_DIM, OUTPUT_DIM, N_LAYERS)

    out = transformer_classifier_forward(src, packed, OUTPUT_DIM)
    out = jax.block_until_ready(out)
    assert out.shape == (SEQ, OUTPUT_DIM), out.shape

    ref = jax.block_until_ready(_reference_forward(src, raw))
    assert jnp.allclose(out, ref, rtol=2e-2, atol=2e-2), (
        float(jnp.max(jnp.abs(out - ref))))

    print("KERNEL_OK")
</pallas_src>

<mosaic_0001>
module attributes {stable_mosaic.version = 11 : i64} {
  func.func @_fused_forward_kernel(%arg0: memref<8x32xf32, #tpu.memory_space<vmem>>, %arg1: memref<2x32x128xbf16, #tpu.memory_space<vmem>>, %arg2: memref<2x32x256xbf16, #tpu.memory_space<vmem>>, %arg3: memref<2x256x32xbf16, #tpu.memory_space<vmem>>, %arg4: memref<2x8x256xf32, #tpu.memory_space<vmem>>, %arg5: memref<32x1024xbf16, #tpu.memory_space<vmem>>, %arg6: memref<1024x128xbf16, #tpu.memory_space<vmem>>, %arg7: memref<2x1024xf32, #tpu.memory_space<vmem>>, %arg8: memref<8x128xf32, #tpu.memory_space<vmem>>) attributes {dimension_semantics = [], scalar_prefetch = 0 : i64, scratch_operands = 0 : i64, tpu.core_type = #tpu.core_type<tc>} {
    %c0 = arith.constant 0 : index
    %c0_0 = arith.constant 0 : index
    %0 = vector.load %arg0[%c0, %c0_0] : memref<8x32xf32, #tpu.memory_space<vmem>>, vector<8x32xf32>
    %1 = tpu.iota {dimensions = array<i32: 1>} : vector<1x32xi32>
    %c0_1 = arith.constant 0 : index
    %c0_2 = arith.constant 0 : index
    %c0_3 = arith.constant 0 : index
    %2 = vector.load %arg4[%c0_1, %c0_2, %c0_3] : memref<2x8x256xf32, #tpu.memory_space<vmem>>, vector<1x8x256xf32>
    %3 = vector.shape_cast %2 : vector<1x8x256xf32> to vector<8x256xf32>
    %4 = vector.extract_strided_slice %3 {offsets = [0, 0], sizes = [1, 128], strides = [1, 1]} : vector<8x256xf32> to vector<1x128xf32>
    %5 = vector.shape_cast %4 : vector<1x128xf32> to vector<128xf32>
    %6 = vector.extract_strided_slice %3 {offsets = [1, 0], sizes = [1, 32], strides = [1, 1]} : vector<8x256xf32> to vector<1x32xf32>
    %7 = vector.shape_cast %6 : vector<1x32xf32> to vector<32xf32>
    %8 = vector.extract_strided_slice %3 {offsets = [2, 0], sizes = [1, 32], strides = [1, 1]} : vector<8x256xf32> to vector<1x32xf32>
    %9 = vector.shape_cast %8 : vector<1x32xf32> to vector<32xf32>
    %10 = vector.extract_strided_slice %3 {offsets = [3, 0], sizes = [1, 32], strides = [1, 1]} : vector<8x256xf32> to vector<1x32xf32>
    %11 = vector.shape_cast %10 : vector<1x32xf32> to vector<32xf32>
    %12 = vector.extract_strided_slice %3 {offsets = [4, 0], sizes = [1, 256], strides = [1, 1]} : vector<8x256xf32> to vector<1x256xf32>
    %13 = vector.shape_cast %12 : vector<1x256xf32> to vector<256xf32>
    %14 = vector.extract_strided_slice %3 {offsets = [5, 0], sizes = [1, 32], strides = [1, 1]} : vector<8x256xf32> to vector<1x32xf32>
    %15 = vector.shape_cast %14 : vector<1x32xf32> to vector<32xf32>
    %16 = vector.extract_strided_slice %3 {offsets = [6, 0], sizes = [1, 32], strides = [1, 1]} : vector<8x256xf32> to vector<1x32xf32>
    %17 = vector.shape_cast %16 : vector<1x32xf32> to vector<32xf32>
    %18 = vector.extract_strided_slice %3 {offsets = [7, 0], sizes = [1, 32], strides = [1, 1]} : vector<8x256xf32> to vector<1x32xf32>
    %19 = vector.shape_cast %18 : vector<1x32xf32> to vector<32xf32>
    %20 = arith.truncf %0 : vector<8x32xf32> to vector<8x32xbf16>
    %c0_4 = arith.constant 0 : index
    %c0_5 = arith.constant 0 : index
    %c0_6 = arith.constant 0 : index
    %21 = vector.load %arg1[%c0_4, %c0_5, %c0_6] : memref<2x32x128xbf16, #tpu.memory_space<vmem>>, vector<1x32x128xbf16>
    %22 = vector.shape_cast %21 : vector<1x32x128xbf16> to vector<32x128xbf16>
    %cst = arith.constant dense<0.000000e+00> : vector<8x128xf32>
    %23 = tpu.matmul %20, %22, %cst {dimension_numbers = #tpu.dot_dimension_numbers<[1], [0], [0], [1], [0, 0, 1, 1], [], []>} : vector<8x32xbf16>, vector<32x128xbf16>, vector<8x128xf32> -> vector<8x128xf32>
    %24 = vector.shape_cast %5 : vector<128xf32> to vector<1x128xf32>
    %25 = vector.broadcast %24 : vector<1x128xf32> to vector<8x128xf32>
    %26 = arith.addf %23, %25 : vector<8x128xf32>
    %27 = vector.extract_strided_slice %26 {offsets = [0, 0], sizes = [8, 32], strides = [1, 1]} : vector<8x128xf32> to vector<8x32xf32>
    %28 = vector.extract_strided_slice %26 {offsets = [0, 32], sizes = [8, 32], strides = [1, 1]} : vector<8x128xf32> to vector<8x32xf32>
    %cst_7 = arith.constant 0.000000e+00 : f32
    %29 = vector.broadcast %cst_7 : f32 to vector<8x32xf32>
    %c0_i32 = arith.constant 0 : i32
    %30 = vector.broadcast %c0_i32 : i32 to vector<1x32xi32>
    %31 = arith.cmpi sge, %1, %30 : vector<1x32xi32>
    %c16_i32 = arith.constant 16 : i32
    %32 = vector.broadcast %c16_i32 : i32 to vector<1x32xi32>
    %33 = arith.cmpi slt, %1, %32 : vector<1x32xi32>
    %34 = arith.andi %31, %33 : vector<1x32xi1>
    %cst_8 = arith.constant 2.500000e-01 : f32
    %cst_9 = arith.constant 0.000000e+00 : f32
    %35 = vector.broadcast %cst_8 : f32 to vector<1x32xf32>
    %36 = vector.broadcast %cst_9 : f32 to vector<1x32xf32>
    %37 = arith.select %34, %35, %36 : vector<1x32xi1>, vector<1x32xf32>
    %38 = vector.broadcast %37 : vector<1x32xf32> to vector<8x32xf32>
    %39 = arith.mulf %27, %38 : vector<8x32xf32>
    %cst_10 = arith.constant dense<0.000000e+00> : vector<8x8xf32>
    %40 = tpu.matmul %39, %28, %cst_10 {dimension_numbers = #tpu.dot_dimension_numbers<[1], [1], [0], [0], [0, 0, 1, 0], [], []>} : vector<8x32xf32>, vector<8x32xf32>, vector<8x8xf32> -> vector<8x8xf32>
    %cst_11 = arith.constant dense<0xFF800000> : vector<8xf32>
    %41 = vector.multi_reduction <maximumf>, %40, %cst_11 [1] : vector<8x8xf32> to vector<8xf32>
    %42 = vector.shape_cast %41 : vector<8xf32> to vector<8x1xf32>
    %43 = vector.broadcast %42 : vector<8x1xf32> to vector<8x8xf32>
    %44 = arith.subf %40, %43 : vector<8x8xf32>
    %45 = math.exp %44 : vector<8x8xf32>
    %cst_12 = arith.constant dense<0.000000e+00> : vector<8xf32>
    %46 = vector.multi_reduction <add>, %45, %cst_12 [1] : vector<8x8xf32> to vector<8xf32>
    %47 = vector.shape_cast %46 : vector<8xf32> to vector<8x1xf32>
    %48 = tpu.reciprocal %47 {approx = true} : vector<8x1xf32> -> vector<8x1xf32>
    %49 = vector.broadcast %48 : vector<8x1xf32> to vector<8x8xf32>
    %50 = arith.mulf %45, %49 : vector<8x8xf32>
    %51 = vector.extract_strided_slice %26 {offsets = [0, 64], sizes = [8, 32], strides = [1, 1]} : vector<8x128xf32> to vector<8x32xf32>
    %cst_13 = arith.constant dense<0.000000e+00> : vector<8x32xf32>
    %52 = tpu.matmul %50, %51, %cst_13 {dimension_numbers = #tpu.dot_dimension_numbers<[1], [0], [0], [1], [0, 0, 1, 1], [], []>} : vector<8x8xf32>, vector<8x32xf32>, vector<8x32xf32> -> vector<8x32xf32>
    %53 = arith.addf %29, %52 : vector<8x32xf32>
    %c16_i32_14 = arith.constant 16 : i32
    %54 = vector.broadcast %c16_i32_14 : i32 to vector<1x32xi32>
    %55 = arith.cmpi sge, %1, %54 : vector<1x32xi32>
    %c32_i32 = arith.constant 32 : i32
    %56 = vector.broadcast %c32_i32 : i32 to vector<1x32xi32>
    %57 = arith.cmpi slt, %1, %56 : vector<1x32xi32>
    %58 = arith.andi %55, %57 : vector<1x32xi1>
    %cst_15 = arith.constant 2.500000e-01 : f32
    %cst_16 = arith.constant 0.000000e+00 : f32
    %59 = vector.broadcast %cst_15 : f32 to vector<1x32xf32>
    %60 = vector.broadcast %cst_16 : f32 to vector<1x32xf32>
    %61 = arith.select %58, %59, %60 : vector<1x32xi1>, vector<1x32xf32>
    %62 = vector.broadcast %61 : vector<1x32xf32> to vector<8x32xf32>
    %63 = arith.mulf %27, %62 : vector<8x32xf32>
    %cst_17 = arith.constant dense<0.000000e+00> : vector<8x8xf32>
    %64 = tpu.matmul %63, %28, %cst_17 {dimension_numbers = #tpu.dot_dimension_numbers<[1], [1], [0], [0], [0, 0, 1, 0], [], []>} : vector<8x32xf32>, vector<8x32xf32>, vector<8x8xf32> -> vector<8x8xf32>
    %cst_18 = arith.constant dense<0xFF800000> : vector<8xf32>
    %65 = vector.multi_reduction <maximumf>, %64, %cst_18 [1] : vector<8x8xf32> to vector<8xf32>
    %66 = vector.shape_cast %65 : vector<8xf32> to vector<8x1xf32>
    %67 = vector.broadcast %66 : vector<8x1xf32> to vector<8x8xf32>
    %68 = arith.subf %64, %67 : vector<8x8xf32>
    %69 = math.exp %68 : vector<8x8xf32>
    %cst_19 = arith.constant dense<0.000000e+00> : vector<8xf32>
    %70 = vector.multi_reduction <add>, %69, %cst_19 [1] : vector<8x8xf32> to vector<8xf32>
    %71 = vector.shape_cast %70 : vector<8xf32> to vector<8x1xf32>
    %72 = tpu.reciprocal %71 {approx = true} : vector<8x1xf32> -> vector<8x1xf32>
    %73 = vector.broadcast %72 : vector<8x1xf32> to vector<8x8xf32>
    %74 = arith.mulf %69, %73 : vector<8x8xf32>
    %75 = vector.extract_strided_slice %26 {offsets = [0, 96], sizes = [8, 32], strides = [1, 1]} : vector<8x128xf32> to vector<8x32xf32>
    %cst_20 = arith.constant dense<0.000000e+00> : vector<8x32xf32>
    %76 = tpu.matmul %74, %75, %cst_20 {dimension_numbers = #tpu.dot_dimension_numbers<[1], [0], [0], [1], [0, 0, 1, 1], [], []>} : vector<8x8xf32>, vector<8x32xf32>, vector<8x32xf32> -> vector<8x32xf32>
    %77 = arith.addf %53, %76 : vector<8x32xf32>
    %78 = vector.shape_cast %7 : vector<32xf32> to vector<1x32xf32>
    %79 = vector.broadcast %78 : vector<1x32xf32> to vector<8x32xf32>
    %80 = arith.addf %77, %79 : vector<8x32xf32>
    %81 = arith.addf %0, %80 : vector<8x32xf32>
    %cst_21 = arith.constant dense<0.000000e+00> : vector<8xf32>
    %82 = vector.multi_reduction <add>, %81, %cst_21 [1] : vector<8x32xf32> to vector<8xf32>
    %83 = vector.shape_cast %82 : vector<8xf32> to vector<8x1xf32>
    %84 = arith.mulf %81, %81 : vector<8x32xf32>
    %cst_22 = arith.constant dense<0.000000e+00> : vector<8xf32>
    %85 = vector.multi_reduction <add>, %84, %cst_22 [1] : vector<8x32xf32> to vector<8xf32>
    %86 = vector.shape_cast %85 : vector<8xf32> to vector<8x1xf32>
    %cst_23 = arith.constant 3.125000e-02 : f32
    %87 = vector.broadcast %cst_23 : f32 to vector<8x1xf32>
    %88 = arith.mulf %83, %87 : vector<8x1xf32>
    %cst_24 = arith.constant 3.125000e-02 : f32
    %89 = vector.broadcast %cst_24 : f32 to vector<8x1xf32>
    %90 = arith.mulf %86, %89 : vector<8x1xf32>
    %91 = arith.mulf %88, %88 : vector<8x1xf32>
    %92 = arith.subf %90, %91 : vector<8x1xf32>
    %93 = vector.broadcast %88 : vector<8x1xf32> to vector<8x32xf32>
    %94 = arith.subf %81, %93 : vector<8x32xf32>
    %cst_25 = arith.constant 9.99999974E-6 : f32
    %95 = vector.broadcast %cst_25 : f32 to vector<8x1xf32>
    %96 = arith.addf %92, %95 : vector<8x1xf32>
    %97 = math.rsqrt %96 : vector<8x1xf32>
    %98 = vector.broadcast %97 : vector<8x1xf32> to vector<8x32xf32>
    %99 = arith.mulf %94, %98 : vector<8x32xf32>
    %100 = vector.shape_cast %9 : vector<32xf32> to vector<1x32xf32>
    %101 = vector.broadcast %100 : vector<1x32xf32> to vector<8x32xf32>
    %102 = arith.mulf %99, %101 : vector<8x32xf32>
    %103 = vector.shape_cast %11 : vector<32xf32> to vector<1x32xf32>
    %104 = vector.broadcast %103 : vector<1x32xf32> to vector<8x32xf32>
    %105 = arith.addf %102, %104 : vector<8x32xf32>
    %106 = arith.truncf %105 : vector<8x32xf32> to vector<8x32xbf16>
    %c0_26 = arith.constant 0 : index
    %c0_27 = arith.constant 0 : index
    %c0_28 = arith.constant 0 : index
    %107 = vector.load %arg2[%c0_26, %c0_27, %c0_28] : memref<2x32x256xbf16, #tpu.memory_space<vmem>>, vector<1x32x256xbf16>
    %108 = vector.shape_cast %107 : vector<1x32x256xbf16> to vector<32x256xbf16>
    %cst_29 = arith.constant dense<0.000000e+00> : vector<8x256xf32>
    %109 = tpu.matmul %106, %108, %cst_29 {dimension_numbers = #tpu.dot_dimension_numbers<[1], [0], [0], [1], [0, 0, 1, 1], [], []>} : vector<8x32xbf16>, vector<32x256xbf16>, vector<8x256xf32> -> vector<8x256xf32>
    %110 = vector.shape_cast %13 : vector<256xf32> to vector<1x256xf32>
    %111 = vector.broadcast %110 : vector<1x256xf32> to vector<8x256xf32>
    %112 = arith.addf %109, %111 : vector<8x256xf32>
    %cst_30 = arith.constant 0.000000e+00 : f32
    %113 = vector.broadcast %cst_30 : f32 to vector<8x256xf32>
    %114 = arith.maximumf %112, %113 : vector<8x256xf32>
    %115 = arith.truncf %114 : vector<8x256xf32> to vector<8x256xbf16>
    %c0_31 = arith.constant 0 : index
    %c0_32 = arith.constant 0 : index
    %c0_33 = arith.constant 0 : index
    %116 = vector.load %arg3[%c0_31, %c0_32, %c0_33] : memref<2x256x32xbf16, #tpu.memory_space<vmem>>, vector<1x256x32xbf16>
    %117 = vector.shape_cast %116 : vector<1x256x32xbf16> to vector<256x32xbf16>
    %cst_34 = arith.constant dense<0.000000e+00> : vector<8x32xf32>
    %118 = tpu.matmul %115, %117, %cst_34 {dimension_numbers = #tpu.dot_dimension_numbers<[1], [0], [0], [1], [0, 0, 1, 1], [], []>} : vector<8x256xbf16>, vector<256x32xbf16>, vector<8x32xf32> -> vector<8x32xf32>
    %119 = vector.shape_cast %15 : vector<32xf32> to vector<1x32xf32>
    %120 = vector.broadcast %119 : vector<1x32xf32> to vector<8x32xf32>
    %121 = arith.addf %118, %120 : vector<8x32xf32>
    %122 = arith.addf %105, %121 : vector<8x32xf32>
    %cst_35 = arith.constant dense<0.000000e+00> : vector<8xf32>
    %123 = vector.multi_reduction <add>, %122, %cst_35 [1] : vector<8x32xf32> to vector<8xf32>
    %124 = vector.shape_cast %123 : vector<8xf32> to vector<8x1xf32>
    %125 = arith.mulf %122, %122 : vector<8x32xf32>
    %cst_36 = arith.constant dense<0.000000e+00> : vector<8xf32>
    %126 = vector.multi_reduction <add>, %125, %cst_36 [1] : vector<8x32xf32> to vector<8xf32>
    %127 = vector.shape_cast %126 : vector<8xf32> to vector<8x1xf32>
    %cst_37 = arith.constant 3.125000e-02 : f32
    %128 = vector.broadcast %cst_37 : f32 to vector<8x1xf32>
    %129 = arith.mulf %124, %128 : vector<8x1xf32>
    %cst_38 = arith.constant 3.125000e-02 : f32
    %130 = vector.broadcast %cst_38 : f32 to vector<8x1xf32>
    %131 = arith.mulf %127, %130 : vector<8x1xf32>
    %132 = arith.mulf %129, %129 : vector<8x1xf32>
    %133 = arith.subf %131, %132 : vector<8x1xf32>
    %134 = vector.broadcast %129 : vector<8x1xf32> to vector<8x32xf32>
    %135 = arith.subf %122, %134 : vector<8x32xf32>
    %cst_39 = arith.constant 9.99999974E-6 : f32
    %136 = vector.broadcast %cst_39 : f32 to vector<8x1xf32>
    %137 = arith.addf %133, %136 : vector<8x1xf32>
    %138 = math.rsqrt %137 : vector<8x1xf32>
    %139 = vector.broadcast %138 : vector<8x1xf32> to vector<8x32xf32>
    %140 = arith.mulf %135, %139 : vector<8x32xf32>
    %141 = vector.shape_cast %17 : vector<32xf32> to vector<1x32xf32>
    %142 = vector.broadcast %141 : vector<1x32xf32> to vector<8x32xf32>
    %143 = arith.mulf %140, %142 : vector<8x32xf32>
    %144 = vector.shape_cast %19 : vector<32xf32> to vector<1x32xf32>
    %145 = vector.broadcast %144 : vector<1x32xf32> to vector<8x32xf32>
    %146 = arith.addf %143, %145 : vector<8x32xf32>
    %c1 = arith.constant 1 : index
    %c0_40 = arith.constant 0 : index
    %c0_41 = arith.constant 0 : index
    %147 = vector.load %arg4[%c1, %c0_40, %c0_41] : memref<2x8x256xf32, #tpu.memory_space<vmem>>, vector<1x8x256xf32>
    %148 = vector.shape_cast %147 : vector<1x8x256xf32> to vector<8x256xf32>
    %149 = vector.extract_strided_slice %148 {offsets = [0, 0], sizes = [1, 128], strides = [1, 1]} : vector<8x256xf32> to vector<1x128xf32>
    %150 = vector.shape_cast %149 : vector<1x128xf32> to vector<128xf32>
    %151 = vector.extract_strided_slice %148 {offsets = [1, 0], sizes = [1, 32], strides = [1, 1]} : vector<8x256xf32> to vector<1x32xf32>
    %152 = vector.shape_cast %151 : vector<1x32xf32> to vector<32xf32>
    %153 = vector.extract_strided_slice %148 {offsets = [2, 0], sizes = [1, 32], strides = [1, 1]} : vector<8x256xf32> to vector<1x32xf32>
    %154 = vector.shape_cast %153 : vector<1x32xf32> to vector<32xf32>
    %155 = vector.extract_strided_slice %148 {offsets = [3, 0], sizes = [1, 32], strides = [1, 1]} : vector<8x256xf32> to vector<1x32xf32>
    %156 = vector.shape_cast %155 : vector<1x32xf32> to vector<32xf32>
    %157 = vector.extract_strided_slice %148 {offsets = [4, 0], sizes = [1, 256], strides = [1, 1]} : vector<8x256xf32> to vector<1x256xf32>
    %158 = vector.shape_cast %157 : vector<1x256xf32> to vector<256xf32>
    %159 = vector.extract_strided_slice %148 {offsets = [5, 0], sizes = [1, 32], strides = [1, 1]} : vector<8x256xf32> to vector<1x32xf32>
    %160 = vector.shape_cast %159 : vector<1x32xf32> to vector<32xf32>
    %161 = arith.truncf %146 : vector<8x32xf32> to vector<8x32xbf16>
    %c1_42 = arith.constant 1 : index
    %c0_43 = arith.constant 0 : index
    %c0_44 = arith.constant 0 : index
    %162 = vector.load %arg1[%c1_42, %c0_43, %c0_44] : memref<2x32x128xbf16, #tpu.memory_space<vmem>>, vector<1x32x128xbf16>
    %163 = vector.shape_cast %162 : vector<1x32x128xbf16> to vector<32x128xbf16>
    %cst_45 = arith.constant dense<0.000000e+00> : vector<8x128xf32>
    %164 = tpu.matmul %161, %163, %cst_45 {dimension_numbers = #tpu.dot_dimension_numbers<[1], [0], [0], [1], [0, 0, 1, 1], [], []>} : vector<8x32xbf16>, vector<32x128xbf16>, vector<8x128xf32> -> vector<8x128xf32>
    %165 = vector.shape_cast %150 : vector<128xf32> to vector<1x128xf32>
    %166 = vector.broadcast %165 : vector<1x128xf32> to vector<8x128xf32>
    %167 = arith.addf %164, %166 : vector<8x128xf32>
    %168 = vector.extract_strided_slice %167 {offsets = [0, 0], sizes = [8, 32], strides = [1, 1]} : vector<8x128xf32> to vector<8x32xf32>
    %169 = vector.extract_strided_slice %167 {offsets = [0, 32], sizes = [8, 32], strides = [1, 1]} : vector<8x128xf32> to vector<8x32xf32>
    %cst_46 = arith.constant 0.000000e+00 : f32
    %170 = vector.broadcast %cst_46 : f32 to vector<8x32xf32>
    %c0_i32_47 = arith.constant 0 : i32
    %171 = vector.broadcast %c0_i32_47 : i32 to vector<1x32xi32>
    %172 = arith.cmpi sge, %1, %171 : vector<1x32xi32>
    %c16_i32_48 = arith.constant 16 : i32
    %173 = vector.broadcast %c16_i32_48 : i32 to vector<1x32xi32>
    %174 = arith.cmpi slt, %1, %173 : vector<1x32xi32>
    %175 = arith.andi %172, %174 : vector<1x32xi1>
    %cst_49 = arith.constant 2.500000e-01 : f32
    %cst_50 = arith.constant 0.000000e+00 : f32
    %176 = vector.broadcast %cst_49 : f32 to vector<1x32xf32>
    %177 = vector.broadcast %cst_50 : f32 to vector<1x32xf32>
    %178 = arith.select %175, %176, %177 : vector<1x32xi1>, vector<1x32xf32>
    %179 = vector.broadcast %178 : vector<1x32xf32> to vector<8x32xf32>
    %180 = arith.mulf %168, %179 : vector<8x32xf32>
    %cst_51 = arith.constant dense<0.000000e+00> : vector<8x8xf32>
    %181 = tpu.matmul %180, %169, %cst_51 {dimension_numbers = #tpu.dot_dimension_numbers<[1], [1], [0], [0], [0, 0, 1, 0], [], []>} : vector<8x32xf32>, vector<8x32xf32>, vector<8x8xf32> -> vector<8x8xf32>
    %cst_52 = arith.constant dense<0xFF800000> : vector<8xf32>
    %182 = vector.multi_reduction <maximumf>, %181, %cst_52 [1] : vector<8x8xf32> to vector<8xf32>
    %183 = vector.shape_cast %182 : vector<8xf32> to vector<8x1xf32>
    %184 = vector.broadcast %183 : vector<8x1xf32> to vector<8x8xf32>
    %185 = arith.subf %181, %184 : vector<8x8xf32>
    %186 = math.exp %185 : vector<8x8xf32>
    %cst_53 = arith.constant dense<0.000000e+00> : vector<8xf32>
    %187 = vector.multi_reduction <add>, %186, %cst_53 [1] : vector<8x8xf32> to vector<8xf32>
    %188 = vector.shape_cast %187 : vector<8xf32> to vector<8x1xf32>
    %189 = tpu.reciprocal %188 {approx = true} : vector<8x1xf32> -> vector<8x1xf32>
    %190 = vector.broadcast %189 : vector<8x1xf32> to vector<8x8xf32>
    %191 = arith.mulf %186, %190 : vector<8x8xf32>
    %192 = vector.extract_strided_slice %167 {offsets = [0, 64], sizes = [8, 32], strides = [1, 1]} : vector<8x128xf32> to vector<8x32xf32>
    %cst_54 = arith.constant dense<0.000000e+00> : vector<8x32xf32>
    %193 = tpu.matmul %191, %192, %cst_54 {dimension_numbers = #tpu.dot_dimension_numbers<[1], [0], [0], [1], [0, 0, 1, 1], [], []>} : vector<8x8xf32>, vector<8x32xf32>, vector<8x32xf32> -> vector<8x32xf32>
    %194 = arith.addf %170, %193 : vector<8x32xf32>
    %c16_i32_55 = arith.constant 16 : i32
    %195 = vector.broadcast %c16_i32_55 : i32 to vector<1x32xi32>
    %196 = arith.cmpi sge, %1, %195 : vector<1x32xi32>
    %c32_i32_56 = arith.constant 32 : i32
    %197 = vector.broadcast %c32_i32_56 : i32 to vector<1x32xi32>
    %198 = arith.cmpi slt, %1, %197 : vector<1x32xi32>
    %199 = arith.andi %196, %198 : vector<1x32xi1>
    %cst_57 = arith.constant 2.500000e-01 : f32
    %cst_58 = arith.constant 0.000000e+00 : f32
    %200 = vector.broadcast %cst_57 : f32 to vector<1x32xf32>
    %201 = vector.broadcast %cst_58 : f32 to vector<1x32xf32>
    %202 = arith.select %199, %200, %201 : vector<1x32xi1>, vector<1x32xf32>
    %203 = vector.broadcast %202 : vector<1x32xf32> to vector<8x32xf32>
    %204 = arith.mulf %168, %203 : vector<8x32xf32>
    %cst_59 = arith.constant dense<0.000000e+00> : vector<8x8xf32>
    %205 = tpu.matmul %204, %169, %cst_59 {dimension_numbers = #tpu.dot_dimension_numbers<[1], [1], [0], [0], [0, 0, 1, 0], [], []>} : vector<8x32xf32>, vector<8x32xf32>, vector<8x8xf32> -> vector<8x8xf32>
    %cst_60 = arith.constant dense<0xFF800000> : vector<8xf32>
    %206 = vector.multi_reduction <maximumf>, %205, %cst_60 [1] : vector<8x8xf32> to vector<8xf32>
    %207 = vector.shape_cast %206 : vector<8xf32> to vector<8x1xf32>
    %208 = vector.broadcast %207 : vector<8x1xf32> to vector<8x8xf32>
    %209 = arith.subf %205, %208 : vector<8x8xf32>
    %210 = math.exp %209 : vector<8x8xf32>
    %cst_61 = arith.constant dense<0.000000e+00> : vector<8xf32>
    %211 = vector.multi_reduction <add>, %210, %cst_61 [1] : vector<8x8xf32> to vector<8xf32>
    %212 = vector.shape_cast %211 : vector<8xf32> to vector<8x1xf32>
    %213 = tpu.reciprocal %212 {approx = true} : vector<8x1xf32> -> vector<8x1xf32>
    %214 = vector.broadcast %213 : vector<8x1xf32> to vector<8x8xf32>
    %215 = arith.mulf %210, %214 : vector<8x8xf32>
    %216 = vector.extract_strided_slice %167 {offsets = [0, 96], sizes = [8, 32], strides = [1, 1]} : vector<8x128xf32> to vector<8x32xf32>
    %cst_62 = arith.constant dense<0.000000e+00> : vector<8x32xf32>
    %217 = tpu.matmul %215, %216, %cst_62 {dimension_numbers = #tpu.dot_dimension_numbers<[1], [0], [0], [1], [0, 0, 1, 1], [], []>} : vector<8x8xf32>, vector<8x32xf32>, vector<8x32xf32> -> vector<8x32xf32>
    %218 = arith.addf %194, %217 : vector<8x32xf32>
    %219 = vector.shape_cast %152 : vector<32xf32> to vector<1x32xf32>
    %220 = vector.broadcast %219 : vector<1x32xf32> to vector<8x32xf32>
    %221 = arith.addf %218, %220 : vector<8x32xf32>
    %222 = arith.addf %146, %221 : vector<8x32xf32>
    %cst_63 = arith.constant dense<0.000000e+00> : vector<8xf32>
    %223 = vector.multi_reduction <add>, %222, %cst_63 [1] : vector<8x32xf32> to vector<8xf32>
    %224 = vector.shape_cast %223 : vector<8xf32> to vector<8x1xf32>
    %225 = arith.mulf %222, %222 : vector<8x32xf32>
    %cst_64 = arith.constant dense<0.000000e+00> : vector<8xf32>
    %226 = vector.multi_reduction <add>, %225, %cst_64 [1] : vector<8x32xf32> to vector<8xf32>
    %227 = vector.shape_cast %226 : vector<8xf32> to vector<8x1xf32>
    %cst_65 = arith.constant 3.125000e-02 : f32
    %228 = vector.broadcast %cst_65 : f32 to vector<8x1xf32>
    %229 = arith.mulf %224, %228 : vector<8x1xf32>
    %cst_66 = arith.constant 3.125000e-02 : f32
    %230 = vector.broadcast %cst_66 : f32 to vector<8x1xf32>
    %231 = arith.mulf %227, %230 : vector<8x1xf32>
    %232 = arith.mulf %229, %229 : vector<8x1xf32>
    %233 = arith.subf %231, %232 : vector<8x1xf32>
    %234 = vector.broadcast %229 : vector<8x1xf32> to vector<8x32xf32>
    %235 = arith.subf %222, %234 : vector<8x32xf32>
    %cst_67 = arith.constant 9.99999974E-6 : f32
    %236 = vector.broadcast %cst_67 : f32 to vector<8x1xf32>
    %237 = arith.addf %233, %236 : vector<8x1xf32>
    %238 = math.rsqrt %237 : vector<8x1xf32>
    %239 = vector.broadcast %238 : vector<8x1xf32> to vector<8x32xf32>
    %240 = arith.mulf %235, %239 : vector<8x32xf32>
    %241 = vector.shape_cast %154 : vector<32xf32> to vector<1x32xf32>
    %242 = vector.broadcast %241 : vector<1x32xf32> to vector<8x32xf32>
    %243 = arith.mulf %240, %242 : vector<8x32xf32>
    %244 = vector.shape_cast %156 : vector<32xf32> to vector<1x32xf32>
    %245 = vector.broadcast %244 : vector<1x32xf32> to vector<8x32xf32>
    %246 = arith.addf %243, %245 : vector<8x32xf32>
    %247 = arith.truncf %246 : vector<8x32xf32> to vector<8x32xbf16>
    %c1_68 = arith.constant 1 : index
    %c0_69 = arith.constant 0 : index
    %c0_70 = arith.constant 0 : index
    %248 = vector.load %arg2[%c1_68, %c0_69, %c0_70] : memref<2x32x256xbf16, #tpu.memory_space<vmem>>, vector<1x32x256xbf16>
    %249 = vector.shape_cast %248 : vector<1x32x256xbf16> to vector<32x256xbf16>
    %cst_71 = arith.constant dense<0.000000e+00> : vector<8x256xf32>
    %250 = tpu.matmul %247, %249, %cst_71 {dimension_numbers = #tpu.dot_dimension_numbers<[1], [0], [0], [1], [0, 0, 1, 1], [], []>} : vector<8x32xbf16>, vector<32x256xbf16>, vector<8x256xf32> -> vector<8x256xf32>
    %251 = vector.shape_cast %158 : vector<256xf32> to vector<1x256xf32>
    %252 = vector.broadcast %251 : vector<1x256xf32> to vector<8x256xf32>
    %253 = arith.addf %250, %252 : vector<8x256xf32>
    %cst_72 = arith.constant 0.000000e+00 : f32
    %254 = vector.broadcast %cst_72 : f32 to vector<8x256xf32>
    %255 = arith.maximumf %253, %254 : vector<8x256xf32>
    %256 = arith.truncf %255 : vector<8x256xf32> to vector<8x256xbf16>
    %c1_73 = arith.constant 1 : index
    %c0_74 = arith.constant 0 : index
    %c0_75 = arith.constant 0 : index
    %257 = vector.load %arg3[%c1_73, %c0_74, %c0_75] : memref<2x256x32xbf16, #tpu.memory_space<vmem>>, vector<1x256x32xbf16>
    %258 = vector.shape_cast %257 : vector<1x256x32xbf16> to vector<256x32xbf16>
    %cst_76 = arith.constant dense<0.000000e+00> : vector<8x32xf32>
    %259 = tpu.matmul %256, %258, %cst_76 {dimension_numbers = #tpu.dot_dimension_numbers<[1], [0], [0], [1], [0, 0, 1, 1], [], []>} : vector<8x256xbf16>, vector<256x32xbf16>, vector<8x32xf32> -> vector<8x32xf32>
    %260 = vector.shape_cast %160 : vector<32xf32> to vector<1x32xf32>
    %261 = vector.broadcast %260 : vector<1x32xf32> to vector<8x32xf32>
    %262 = arith.addf %259, %261 : vector<8x32xf32>
    %263 = arith.addf %246, %262 : vector<8x32xf32>
    %cst_77 = arith.constant dense<0.000000e+00> : vector<8xf32>
    %264 = vector.multi_reduction <add>, %263, %cst_77 [1] : vector<8x32xf32> to vector<8xf32>
    %265 = vector.shape_cast %264 : vector<8xf32> to vector<8x1xf32>
    %266 = arith.mulf %263, %263 : vector<8x32xf32>
    %cst_78 = arith.constant dense<0.000000e+00> : vector<8xf32>
    %267 = vector.multi_reduction <add>, %266, %cst_78 [1] : vector<8x32xf32> to vector<8xf32>
    %268 = vector.shape_cast %267 : vector<8xf32> to vector<8x1xf32>
    %cst_79 = arith.constant 3.125000e-02 : f32
    %269 = vector.broadcast %cst_79 : f32 to vector<8x1xf32>
    %270 = arith.mulf %265, %269 : vector<8x1xf32>
    %cst_80 = arith.constant 3.125000e-02 : f32
    %271 = vector.broadcast %cst_80 : f32 to vector<8x1xf32>
    %272 = arith.mulf %268, %271 : vector<8x1xf32>
    %273 = arith.mulf %270, %270 : vector<8x1xf32>
    %274 = arith.subf %272, %273 : vector<8x1xf32>
    %275 = vector.broadcast %270 : vector<8x1xf32> to vector<8x32xf32>
    %276 = arith.subf %263, %275 : vector<8x32xf32>
    %cst_81 = arith.constant 9.99999974E-6 : f32
    %277 = vector.broadcast %cst_81 : f32 to vector<8x1xf32>
    %278 = arith.addf %274, %277 : vector<8x1xf32>
    %279 = math.rsqrt %278 : vector<8x1xf32>
    %280 = vector.broadcast %279 : vector<8x1xf32> to vector<8x32xf32>
    %281 = arith.mulf %276, %280 : vector<8x32xf32>
    %c0_82 = arith.constant 0 : index
    %c0_83 = arith.constant 0 : index
    %282 = vector.load %arg7[%c0_82, %c0_83] : memref<2x1024xf32, #tpu.memory_space<vmem>>, vector<2x1024xf32>
    %283 = arith.truncf %281 : vector<8x32xf32> to vector<8x32xbf16>
    %c0_84 = arith.constant 0 : index
    %c0_85 = arith.constant 0 : index
    %284 = vector.load %arg5[%c0_84, %c0_85] : memref<32x1024xbf16, #tpu.memory_space<vmem>>, vector<32x1024xbf16>
    %cst_86 = arith.constant dense<0.000000e+00> : vector<8x1024xf32>
    %285 = tpu.matmul %283, %284, %cst_86 {dimension_numbers = #tpu.dot_dimension_numbers<[1], [0], [0], [1], [0, 0, 1, 1], [], []>} : vector<8x32xbf16>, vector<32x1024xbf16>, vector<8x1024xf32> -> vector<8x1024xf32>
    %286 = vector.extract_strided_slice %282 {offsets = [0, 0], sizes = [1, 1024], strides = [1, 1]} : vector<2x1024xf32> to vector<1x1024xf32>
    %287 = vector.shape_cast %286 : vector<1x1024xf32> to vector<1024xf32>
    %288 = vector.shape_cast %287 : vector<1024xf32> to vector<1x1024xf32>
    %289 = vector.broadcast %288 : vector<1x1024xf32> to vector<8x1024xf32>
    %290 = arith.addf %285, %289 : vector<8x1024xf32>
    %cst_87 = arith.constant 0.000000e+00 : f32
    %291 = vector.broadcast %cst_87 : f32 to vector<8x1024xf32>
    %292 = arith.maximumf %290, %291 : vector<8x1024xf32>
    %293 = arith.truncf %292 : vector<8x1024xf32> to vector<8x1024xbf16>
    %c0_88 = arith.constant 0 : index
    %c0_89 = arith.constant 0 : index
    %294 = vector.load %arg6[%c0_88, %c0_89] : memref<1024x128xbf16, #tpu.memory_space<vmem>>, vector<1024x128xbf16>
    %cst_90 = arith.constant dense<0.000000e+00> : vector<8x128xf32>
    %295 = tpu.matmul %293, %294, %cst_90 {dimension_numbers = #tpu.dot_dimension_numbers<[1], [0], [0], [1], [0, 0, 1, 1], [], []>} : vector<8x1024xbf16>, vector<1024x128xbf16>, vector<8x128xf32> -> vector<8x128xf32>
    %296 = vector.extract_strided_slice %282 {offsets = [1, 0], sizes = [1, 128], strides = [1, 1]} : vector<2x1024xf32> to vector<1x128xf32>
    %297 = vector.shape_cast %296 : vector<1x128xf32> to vector<128xf32>
    %298 = vector.shape_cast %297 : vector<128xf32> to vector<1x128xf32>
    %299 = vector.broadcast %298 : vector<1x128xf32> to vector<8x128xf32>
    %300 = arith.addf %295, %299 : vector<8x128xf32>
    %c0_91 = arith.constant 0 : index
    %c0_92 = arith.constant 0 : index
    %301 = vector.load %arg8[%c0_91, %c0_92] : memref<8x128xf32, #tpu.memory_space<vmem>>, vector<8x128xf32>
    tpu.vector_store %arg8[%c0_91, %c0_92], %300 {strides = array<i32>} : memref<8x128xf32, #tpu.memory_space<vmem>>, vector<8x128xf32>,
    return
  }
}

</mosaic_0001>

<llo_original>
// kernel: tpu_custom_call.1
$region0: #{tpu_custom_call.1}
  #allocation0 [shape = 'u32[]', space=smem, size = 0x4, offset = 0x4, fixed_abs, tag = 'smem constant byte address 0x4 - core index']
  #allocation1 [shape = 'u32[144,128]{1,0:T(1,128)}', space=vmem, size = 0x12000, scoped, tag = 'internal scratch']
  %s0 = inlined_call_operand.vmem [shape: f32[8,32], index: 0, kind: input, shape index: {}]
  %s1 = inlined_call_operand.vmem [shape: bf16[2,32,128], index: 1, kind: input, shape index: {}]
  %s2 = inlined_call_operand.vmem [shape: bf16[2,32,256], index: 2, kind: input, shape index: {}]
  %s3 = inlined_call_operand.vmem [shape: bf16[2,256,32], index: 3, kind: input, shape index: {}]
  %s4 = inlined_call_operand.vmem [shape: f32[2,8,256], index: 4, kind: input, shape index: {}]
  %s5 = inlined_call_operand.vmem [shape: bf16[32,1024], index: 5, kind: input, shape index: {}]
  %s6 = inlined_call_operand.hbm [shape: bf16[1024,128], index: 6, kind: input, shape index: {}]
  %s7 = inlined_call_operand.vmem [shape: f32[2,1024], index: 7, kind: input, shape index: {}]
  %s8 = inlined_call_operand.hbm [shape: f32[8,128], index: 8, kind: output, shape index: {}]
  %s9 = sld [smem:[#allocation0]]
  $region46: #{tpu_custom_call.1} parent=0
    _
  %s11 = ssub.s32 1, %s9
  %s12 = scalar_select 0, %s11, %s9
  $region1: #{tpu_custom_call.1} parent=0
    #allocation2 [shape = 'u8[262144]{0}', space=vmem, size = 0x40000, scoped, tag = 'input window, operand 6, single buffered']
    #allocation3 [shape = 's32[1]{0}', space=sflag, size = 0x4, scoped, tag = 'scoped memory for tpu_custom_call.1']
    #allocation4 [shape = 's32[1]{0}', space=sflag, size = 0x4, scoped, tag = 'scoped memory for tpu_custom_call.1']
    #allocation5 [shape = 'u8[4096]{0}', space=vmem, size = 0x1000, scoped, tag = 'output window, operand 0, single buffered']
    %13 = vsyncpa [#allocation3], 0
    %14 = vsyncpa [#allocation4], 0
    // Predicated region
    $region2: #{tpu_custom_call.1} parent=1 // pred_check
      _
    $region3: #{tpu_custom_call.1} parent=1 // pred_check_branch
      %16 = sbr.rel (0) target = $region5
    $region4: #{tpu_custom_call.1} parent=1 // pred_region
      _
    $region5: #{tpu_custom_call.1} parent=1 // pred_fallthru
      _
    // Predicated region
    $region6: #{tpu_custom_call.1} parent=1 // pred_check
      _
    $region7: #{tpu_custom_call.1} parent=1 // pred_check_branch
      %18 = sbr.rel (0) target = $region9
    $region8: #{tpu_custom_call.1} parent=1 // pred_region
      _
    $region9: #{tpu_custom_call.1} parent=1 // pred_fallthru
      _
    // Predicated region
    $region10: #{tpu_custom_call.1} parent=1 // pred_check
      _
    $region11: #{tpu_custom_call.1} parent=1 // pred_check_branch
      %20 = sbr.rel (0) target = $region13
    $region12: #{tpu_custom_call.1} parent=1 // pred_region
      _
    $region13: #{tpu_custom_call.1} parent=1 // pred_fallthru
      _
    // Predicated region
    $region14: #{tpu_custom_call.1} parent=1 // pred_check
      _
    $region15: #{tpu_custom_call.1} parent=1 // pred_check_branch
      %22 = sbr.rel (0) target = $region17
    $region16: #{tpu_custom_call.1} parent=1 // pred_region
      _
    $region17: #{tpu_custom_call.1} parent=1 // pred_fallthru
      _
    // Predicated region
    $region18: #{tpu_custom_call.1} parent=1 // pred_check
      _
    $region19: #{tpu_custom_call.1} parent=1 // pred_check_branch
      %24 = sbr.rel (0) target = $region21
    $region20: #{tpu_custom_call.1} parent=1 // pred_region
      _
    $region21: #{tpu_custom_call.1} parent=1 // pred_fallthru
      _
    // Predicated region
    $region22: #{tpu_custom_call.1} parent=1 // pred_check
      _
    $region23: #{tpu_custom_call.1} parent=1 // pred_check_branch
      %26 = sbr.rel (0) target = $region25
    $region24: #{tpu_custom_call.1} parent=1 // pred_region
      _
    $region25: #{tpu_custom_call.1} parent=1 // pred_fallthru
      _
    // Predicated region
    $region26: #{tpu_custom_call.1} parent=1 // pred_check
      _
    $region27: #{tpu_custom_call.1} parent=1 // pred_check_branch
      %28 = sbr.rel (0) target = $region29
    $region28: #{tpu_custom_call.1} parent=1 // pred_region
      %s30 = ssub.s32 8192, 8192
      %31 = vsyncadd [#allocation3], %s30
      %s32 = sshll.u32 [#allocation2], 4
      %s33 = int_to_ptr.vmem [resolvable:$true] %s32
      %38 = dma.hbm_to_vmem [thread:$0]  %s6, 8192, %s33, [#allocation3], 64, 64, 4
    $region29: #{tpu_custom_call.1} parent=1 // pred_fallthru
      _
    // Predicated region
    $region30: #{tpu_custom_call.1} parent=1 // pred_check
      _
    $region31: #{tpu_custom_call.1} parent=1 // pred_check_branch
      %40 = sbr.rel (0) target = $region33
    $region32: #{tpu_custom_call.1} parent=1 // pred_region
      _
    $region33: #{tpu_custom_call.1} parent=1 // pred_fallthru
      _
    // Predicated region
    $region34: #{tpu_custom_call.1} parent=1 // pred_check
      _
    $region35: #{tpu_custom_call.1} parent=1 // pred_check_branch
      %42 = sbr.rel (0) target = $region37
    $region36: #{tpu_custom_call.1} parent=1 // pred_region
      %43 = dma.done [#allocation3], 8192
    $region37: #{tpu_custom_call.1} parent=1 // pred_fallthru
      _
    %v45 = vld [vmem:[%s0] sm:$0xff]
    %v46 = vlaneseq
    %v47 = vand.u32 %v46, 127
    %v48 = vld [vmem:[%s4] sm:$0xff]
    %v49 = vld [vmem:[%s4 + $0x8] sm:$0xff]
    %v50 = vpack.c.bf16 %v45, %v45
    %v51 = vld [vmem:[%s1] sm:$0xf]
    %v52 = vld [vmem:[%s1 + $0x4] sm:$0xf]
    %v53 = vld [vmem:[%s1 + $0x8] sm:$0xf]
    %v54 = vld [vmem:[%s1 + $0xc] sm:$0xf]
    %v55 = vlaneseq
    %v56 = vshrl.u32 %v55, 7
    %v57 = vsub.s32 0, %v56
    %v58 = vrot.slane %v48, %v57
    %v63 = vunpack.c.l.b16 %v51
    %v64 = vunpack.c.l.b16 %v52
    %v65 = vunpack.c.l.b16 %v53
    %v66 = vunpack.c.l.b16 %v54
    %v67 = vpack.c.b16 %v64, %v63
    %v68 = vpack.c.b16 %v66, %v65
    %vm71 = vcmask 261120
    %v73 = vsel %vm71, %v50, 0
    %75 = vmatprep.subr.bf16.mxu0 0
    %76 = vmatpush1.bf16.msra.mxu0 0
    %77 = vmatprep.subr.bf16.mxu0 0
    %78 = vmatpush1.bf16.msra.mxu0 0
    %79 = vmatprep.subr.bf16.mxu0 0
    %80 = vmatpush1.bf16.msra.mxu0 0
    %81 = vmatprep.subr.bf16.mxu0 0
    %82 = vmatpush1.bf16.msra.mxu0 0
    %83 = vmatprep.subr.bf16.mxu0 0
    %84 = vmatpush1.bf16.msra.mxu0 0
    %85 = vmatprep.subr.bf16.mxu0 0
    %86 = vmatpush1.bf16.msra.mxu0 0
    %87 = vmatprep.subr.bf16.mxu0 0
    %88 = vmatpush1.bf16.msra.mxu0 %v68
    %89 = vmatprep.subr.bf16.mxu0 0
    %90 = vmatpush1.bf16.msra.mxu0 %v67
    %91 = vmatprep.subr.bf16.mxu0 0
    %92 = vmatpush2.bf16.msra.mxu0 0
    %93 = vmatprep.subr.bf16.mxu0 0
    %94 = vmatpush2.bf16.msra.mxu0 0
    %95 = vmatprep.subr.bf16.mxu0 0
    %96 = vmatpush2.bf16.msra.mxu0 0
    %97 = vmatprep.subr.bf16.mxu0 0
    %98 = vmatpush2.bf16.msra.mxu0 0
    %99 = vmatprep.subr.bf16.mxu0 0
    %100 = vmatpush2.bf16.msra.mxu0 0
    %101 = vmatprep.subr.bf16.mxu0 0
    %102 = vmatpush2.bf16.msra.mxu0 0
    %103 = vmatprep.subr.bf16.mxu0 0
    %104 = vmatpush2.bf16.msra.mxu0 0
    %105 = vmatprep.subr.bf16.mxu0 0
    %106 = vmatpush2.bf16.msra.mxu0 0
    %107 = vmatprep.mubr.bf16.mxu0 0
    %108 = vmatmul.mubr.bf16.gmra.mxu0 %v73
    %v109 = vpop.f32.mrf.mxu0
    %v110 = vadd.f32 %v58, %v109
    %v111 = vpop.f32.mrf.mxu0
    %v112 = vpop.f32.mrf.mxu0
    %v113 = vpop.f32.mrf.mxu0
    %114 = vdwg.mxu0
    %vm115 = vcmp.ge.s32.totalorder %v47, 0
    %vm116 = vcmp.lt.s32.totalorder %v47, 16
    %vm117 = vmand %vm115, %vm116
    %v118 = vsel %vm117, 0.25, 0.0
    %v119 = vmul.f32 %v110, %v118
    %121 = vrot.lane.b32.xlu0 %v110, 96
    %v122 = vpop.permute.xlu0 %121
    %v124 = vsel %vm71, %v119, 0
    %v126 = vsel %vm71, %v122, 0
    %128 = vmatprep.subr.mxu0 0.0
    %129 = vmatpush1.xpose.msra.mxu0 0.0
    %130 = vmatprep.subr.mxu0 0.0
    %131 = vmatpush1.xpose.msra.mxu0 0.0
    %132 = vmatprep.subr.mxu0 0.0
    %133 = vmatpush1.xpose.msra.mxu0 0.0
    %134 = vmatprep.subr.mxu0 0.0
    %135 = vmatpush1.xpose.msra.mxu0 0.0
    %136 = vmatprep.subr.mxu0 0.0
    %137 = vmatpush1.xpose.msra.mxu0 0.0
    %138 = vmatprep.subr.mxu0 0.0
    %139 = vmatpush1.xpose.msra.mxu0 0.0
    %140 = vmatprep.subr.mxu0 0.0
    %141 = vmatpush1.xpose.msra.mxu0 0.0
    %142 = vmatprep.subr.mxu0 0.0
    %143 = vmatpush1.xpose.msra.mxu0 0.0
    %144 = vmatprep.subr.mxu0 0.0
    %145 = vmatpush1.xpose.msra.mxu0 0.0
    %146 = vmatprep.subr.mxu0 0.0
    %147 = vmatpush1.xpose.msra.mxu0 0.0
    %148 = vmatprep.subr.mxu0 0.0
    %149 = vmatpush1.xpose.msra.mxu0 0.0
    %150 = vmatprep.subr.mxu0 0.0
    %151 = vmatpush1.xpose.msra.mxu0 0.0
    %152 = vmatprep.subr.mxu0 0.0
    %153 = vmatpush1.xpose.msra.mxu0 0.0
    %154 = vmatprep.subr.mxu0 0.0
    %155 = vmatpush1.xpose.msra.mxu0 0.0
    %156 = vmatprep.subr.mxu0 0.0
    %157 = vmatpush1.xpose.msra.mxu0 0.0
    %158 = vmatprep.subr.mxu0 0.0
    %159 = vmatpush1.xpose.msra.mxu0 %v126
    %160 = vmatprep.subr.mxu0 0.0
    %161 = vmatpush2.xpose.msra.mxu0 0.0
    %162 = vmatprep.subr.mxu0 0.0
    %163 = vmatpush2.xpose.msra.mxu0 0.0
    %164 = vmatprep.subr.mxu0 0.0
    %165 = vmatpush2.xpose.msra.mxu0 0.0
    %166 = vmatprep.subr.mxu0 0.0
    %167 = vmatpush2.xpose.msra.mxu0 0.0
    %168 = vmatprep.subr.mxu0 0.0
    %169 = vmatpush2.xpose.msra.mxu0 0.0
    %170 = vmatprep.subr.mxu0 0.0
    %171 = vmatpush2.xpose.msra.mxu0 0.0
    %172 = vmatprep.subr.mxu0 0.0
    %173 = vmatpush2.xpose.msra.mxu0 0.0
    %174 = vmatprep.subr.mxu0 0.0
    %175 = vmatpush2.xpose.msra.mxu0 0.0
    %176 = vmatprep.subr.mxu0 0.0
    %177 = vmatpush2.xpose.msra.mxu0 0.0
    %178 = vmatprep.subr.mxu0 0.0
    %179 = vmatpush2.xpose.msra.mxu0 0.0
    %180 = vmatprep.subr.mxu0 0.0
    %181 = vmatpush2.xpose.msra.mxu0 0.0
    %182 = vmatprep.subr.mxu0 0.0
    %183 = vmatpush2.xpose.msra.mxu0 0.0
    %184 = vmatprep.subr.mxu0 0.0
    %185 = vmatpush2.xpose.msra.mxu0 0.0
    %186 = vmatprep.subr.mxu0 0.0
    %187 = vmatpush2.xpose.msra.mxu0 0.0
    %188 = vmatprep.subr.mxu0 0.0
    %189 = vmatpush2.xpose.msra.mxu0 0.0
    %190 = vmatprep.subr.mxu0 0.0
    %191 = vmatpush2.xpose.msra.mxu0 0.0
    %192 = vmatprep.mubr.f32.mxu0 0.0
    %193 = vmatmul.mubr.f32.gmra.mxu0 %v124
    %v194 = vpop.f32.mrf.mxu0
    %v195 = vadd.f32 0.0, %v194
    %v196 = vpop.f32.mrf.mxu0
    %197 = vdwg.mxu0
    %vm198 = vcmask 64512
    %v199 = vsel %vm198, %v195, -inf
    %200 = vmax.xlane.f32.xlu0 %v199
    %v201 = vpop.xlane.xlu0 %200
    %v202 = vsub.f32 %v195, %v201
    %v203 = vmul.f32 %v202, 1.442695
    %v204 = vpow.pop %v203
    %v205 = vsel %vm198, %v204, 0.0
    %206 = vadd.xlane.f32.xlu0 %v205
    %v207 = vpop.xlane.xlu0 %206
    %v208 = vrcp.pop %v207
    %v209 = vmul.f32 %v204, %v208
    %vm210 = vcmp.ge.s32.totalorder %v47, 16
    %vm211 = vcmp.lt.s32.totalorder %v47, 32
    %vm212 = vmand %vm210, %vm211
    %v213 = vsel %vm212, 0.25, 0.0
    %v214 = vmul.f32 %v110, %v213
    %v216 = vsel %vm71, %v214, 0
    %218 = vmatprep.subr.mxu0 0.0
    %219 = vmatpush1.xpose.msra.mxu0 0.0
    %220 = vmatprep.subr.mxu0 0.0
    %221 = vmatpush1.xpose.msra.mxu0 0.0
    %222 = vmatprep.subr.mxu0 0.0
    %223 = vmatpush1.xpose.msra.mxu0 0.0
    %224 = vmatprep.subr.mxu0 0.0
    %225 = vmatpush1.xpose.msra.mxu0 0.0
    %226 = vmatprep.subr.mxu0 0.0
    %227 = vmatpush1.xpose.msra.mxu0 0.0
    %228 = vmatprep.subr.mxu0 0.0
    %229 = vmatpush1.xpose.msra.mxu0 0.0
    %230 = vmatprep.subr.mxu0 0.0
    %231 = vmatpush1.xpose.msra.mxu0 0.0
    %232 = vmatprep.subr.mxu0 0.0
    %233 = vmatpush1.xpose.msra.mxu0 0.0
    %234 = vmatprep.subr.mxu0 0.0
    %235 = vmatpush1.xpose.msra.mxu0 0.0
    %236 = vmatprep.subr.mxu0 0.0
    %237 = vmatpush1.xpose.msra.mxu0 0.0
    %238 = vmatprep.subr.mxu0 0.0
    %239 = vmatpush1.xpose.msra.mxu0 0.0
    %240 = vmatprep.subr.mxu0 0.0
    %241 = vmatpush1.xpose.msra.mxu0 0.0
    %242 = vmatprep.subr.mxu0 0.0
    %243 = vmatpush1.xpose.msra.mxu0 0.0
    %244 = vmatprep.subr.mxu0 0.0
    %245 = vmatpush1.xpose.msra.mxu0 0.0
    %246 = vmatprep.subr.mxu0 0.0
    %247 = vmatpush1.xpose.msra.mxu0 0.0
    %248 = vmatprep.subr.mxu0 0.0
    %249 = vmatpush1.xpose.msra.mxu0 %v126
    %250 = vmatprep.subr.mxu0 0.0
    %251 = vmatpush2.xpose.msra.mxu0 0.0
    %252 = vmatprep.subr.mxu0 0.0
    %253 = vmatpush2.xpose.msra.mxu0 0.0
    %254 = vmatprep.subr.mxu0 0.0
    %255 = vmatpush2.xpose.msra.mxu0 0.0
    %256 = vmatprep.subr.mxu0 0.0
    %257 = vmatpush2.xpose.msra.mxu0 0.0
    %258 = vmatprep.subr.mxu0 0.0
    %259 = vmatpush2.xpose.msra.mxu0 0.0
    %260 = vmatprep.subr.mxu0 0.0
    %261 = vmatpush2.xpose.msra.mxu0 0.0
    %262 = vmatprep.subr.mxu0 0.0
    %263 = vmatpush2.xpose.msra.mxu0 0.0
    %264 = vmatprep.subr.mxu0 0.0
    %265 = vmatpush2.xpose.msra.mxu0 0.0
    %266 = vmatprep.subr.mxu0 0.0
    %267 = vmatpush2.xpose.msra.mxu0 0.0
    %268 = vmatprep.subr.mxu0 0.0
    %269 = vmatpush2.xpose.msra.mxu0 0.0
    %270 = vmatprep.subr.mxu0 0.0
    %271 = vmatpush2.xpose.msra.mxu0 0.0
    %272 = vmatprep.subr.mxu0 0.0
    %273 = vmatpush2.xpose.msra.mxu0 0.0
    %274 = vmatprep.subr.mxu0 0.0
    %275 = vmatpush2.xpose.msra.mxu0 0.0
    %276 = vmatprep.subr.mxu0 0.0
    %277 = vmatpush2.xpose.msra.mxu0 0.0
    %278 = vmatprep.subr.mxu0 0.0
    %279 = vmatpush2.xpose.msra.mxu0 0.0
    %280 = vmatprep.subr.mxu0 0.0
    %281 = vmatpush2.xpose.msra.mxu0 0.0
    %282 = vmatprep.mubr.f32.mxu0 0.0
    %283 = vmatmul.mubr.f32.gmra.mxu0 %v216
    %v284 = vpop.f32.mrf.mxu0
    %v285 = vadd.f32 0.0, %v284
    %v286 = vpop.f32.mrf.mxu0
    %287 = vdwg.mxu0
    %v288 = vsel %vm198, %v285, -inf
    %289 = vmax.xlane.f32.xlu0 %v288
    %v290 = vpop.xlane.xlu0 %289
    %v291 = vsub.f32 %v285, %v290
    %v292 = vmul.f32 %v291, 1.442695
    %v293 = vpow.pop %v292
    %v294 = vsel %vm198, %v293, 0.0
    %295 = vadd.xlane.f32.xlu0 %v294
    %v296 = vpop.xlane.xlu0 %295
    %v297 = vrcp.pop %v296
    %v298 = vmul.f32 %v293, %v297
    %299 = vrot.lane.b32.xlu0 %v110, 32
    %v300 = vpop.permute.xlu0 %299
    %v303 = vsel %vm198, %v298, 0
    %305 = vmatprep.subr.mxu0 0.0
    %306 = vmatpush1.msra.mxu0 0.0
    %307 = vmatprep.subr.mxu0 0.0
    %308 = vmatpush1.msra.mxu0 0.0
    %309 = vmatprep.subr.mxu0 0.0
    %310 = vmatpush1.msra.mxu0 0.0
    %311 = vmatprep.subr.mxu0 0.0
    %312 = vmatpush1.msra.mxu0 0.0
    %313 = vmatprep.subr.mxu0 0.0
    %314 = vmatpush1.msra.mxu0 0.0
    %315 = vmatprep.subr.mxu0 0.0
    %316 = vmatpush1.msra.mxu0 0.0
    %317 = vmatprep.subr.mxu0 0.0
    %318 = vmatpush1.msra.mxu0 0.0
    %319 = vmatprep.subr.mxu0 0.0
    %320 = vmatpush1.msra.mxu0 0.0
    %321 = vmatprep.subr.mxu0 0.0
    %322 = vmatpush1.msra.mxu0 0.0
    %323 = vmatprep.subr.mxu0 0.0
    %324 = vmatpush1.msra.mxu0 0.0
    %325 = vmatprep.subr.mxu0 0.0
    %326 = vmatpush1.msra.mxu0 0.0
    %327 = vmatprep.subr.mxu0 0.0
    %328 = vmatpush1.msra.mxu0 0.0
    %329 = vmatprep.subr.mxu0 0.0
    %330 = vmatpush1.msra.mxu0 0.0
    %331 = vmatprep.subr.mxu0 0.0
    %332 = vmatpush1.msra.mxu0 0.0
    %333 = vmatprep.subr.mxu0 0.0
    %334 = vmatpush1.msra.mxu0 0.0
    %335 = vmatprep.subr.mxu0 0.0
    %336 = vmatpush1.msra.mxu0 %v300
    %337 = vmatprep.subr.mxu0 0.0
    %338 = vmatpush2.msra.mxu0 0.0
    %339 = vmatprep.subr.mxu0 0.0
    %340 = vmatpush2.msra.mxu0 0.0
    %341 = vmatprep.subr.mxu0 0.0
    %342 = vmatpush2.msra.mxu0 0.0
    %343 = vmatprep.subr.mxu0 0.0
    %344 = vmatpush2.msra.mxu0 0.0
    %345 = vmatprep.subr.mxu0 0.0
    %346 = vmatpush2.msra.mxu0 0.0
    %347 = vmatprep.subr.mxu0 0.0
    %348 = vmatpush2.msra.mxu0 0.0
    %349 = vmatprep.subr.mxu0 0.0
    %350 = vmatpush2.msra.mxu0 0.0
    %351 = vmatprep.subr.mxu0 0.0
    %352 = vmatpush2.msra.mxu0 0.0
    %353 = vmatprep.subr.mxu0 0.0
    %354 = vmatpush2.msra.mxu0 0.0
    %355 = vmatprep.subr.mxu0 0.0
    %356 = vmatpush2.msra.mxu0 0.0
    %357 = vmatprep.subr.mxu0 0.0
    %358 = vmatpush2.msra.mxu0 0.0
    %359 = vmatprep.subr.mxu0 0.0
    %360 = vmatpush2.msra.mxu0 0.0
    %361 = vmatprep.subr.mxu0 0.0
    %362 = vmatpush2.msra.mxu0 0.0
    %363 = vmatprep.subr.mxu0 0.0
    %364 = vmatpush2.msra.mxu0 0.0
    %365 = vmatprep.subr.mxu0 0.0
    %366 = vmatpush2.msra.mxu0 0.0
    %367 = vmatprep.subr.mxu0 0.0
    %368 = vmatpush2.msra.mxu0 0.0
    %369 = vmatprep.mubr.f32.mxu0 0.0
    %370 = vmatmul.mubr.f32.gmra.mxu0 %v303
    %v371 = vpop.f32.mrf.mxu0
    %v372 = vadd.f32 0.0, %v371
    %v373 = vpop.f32.mrf.mxu0
    %374 = vdwg.mxu0
    %375 = vrot.lane.b32.xlu0 %v110, 64
    %v376 = vpop.permute.xlu0 %375
    %v379 = vsel %vm198, %v209, 0
    %381 = vmatprep.subr.mxu0 0.0
    %382 = vmatpush1.msra.mxu0 0.0
    %383 = vmatprep.subr.mxu0 0.0
    %384 = vmatpush1.msra.mxu0 0.0
    %385 = vmatprep.subr.mxu0 0.0
    %386 = vmatpush1.msra.mxu0 0.0
    %387 = vmatprep.subr.mxu0 0.0
    %388 = vmatpush1.msra.mxu0 0.0
    %389 = vmatprep.subr.mxu0 0.0
    %390 = vmatpush1.msra.mxu0 0.0
    %391 = vmatprep.subr.mxu0 0.0
    %392 = vmatpush1.msra.mxu0 0.0
    %393 = vmatprep.subr.mxu0 0.0
    %394 = vmatpush1.msra.mxu0 0.0
    %395 = vmatprep.subr.mxu0 0.0
    %396 = vmatpush1.msra.mxu0 0.0
    %397 = vmatprep.subr.mxu0 0.0
    %398 = vmatpush1.msra.mxu0 0.0
    %399 = vmatprep.subr.mxu0 0.0
    %400 = vmatpush1.msra.mxu0 0.0
    %401 = vmatprep.subr.mxu0 0.0
    %402 = vmatpush1.msra.mxu0 0.0
    %403 = vmatprep.subr.mxu0 0.0
    %404 = vmatpush1.msra.mxu0 0.0
    %405 = vmatprep.subr.mxu0 0.0
    %406 = vmatpush1.msra.mxu0 0.0
    %407 = vmatprep.subr.mxu0 0.0
    %408 = vmatpush1.msra.mxu0 0.0
    %409 = vmatprep.subr.mxu0 0.0
    %410 = vmatpush1.msra.mxu0 0.0
    %411 = vmatprep.subr.mxu0 0.0
    %412 = vmatpush1.msra.mxu0 %v376
    %413 = vmatprep.subr.mxu0 0.0
    %414 = vmatpush2.msra.mxu0 0.0
    %415 = vmatprep.subr.mxu0 0.0
    %416 = vmatpush2.msra.mxu0 0.0
    %417 = vmatprep.subr.mxu0 0.0
    %418 = vmatpush2.msra.mxu0 0.0
    %419 = vmatprep.subr.mxu0 0.0
    %420 = vmatpush2.msra.mxu0 0.0
    %421 = vmatprep.subr.mxu0 0.0
    %422 = vmatpush2.msra.mxu0 0.0
    %423 = vmatprep.subr.mxu0 0.0
    %424 = vmatpush2.msra.mxu0 0.0
    %425 = vmatprep.subr.mxu0 0.0
    %426 = vmatpush2.msra.mxu0 0.0
    %427 = vmatprep.subr.mxu0 0.0
    %428 = vmatpush2.msra.mxu0 0.0
    %429 = vmatprep.subr.mxu0 0.0
    %430 = vmatpush2.msra.mxu0 0.0
    %431 = vmatprep.subr.mxu0 0.0
    %432 = vmatpush2.msra.mxu0 0.0
    %433 = vmatprep.subr.mxu0 0.0
    %434 = vmatpush2.msra.mxu0 0.0
    %435 = vmatprep.subr.mxu0 0.0
    %436 = vmatpush2.msra.mxu0 0.0
    %437 = vmatprep.subr.mxu0 0.0
    %438 = vmatpush2.msra.mxu0 0.0
    %439 = vmatprep.subr.mxu0 0.0
    %440 = vmatpush2.msra.mxu0 0.0
    %441 = vmatprep.subr.mxu0 0.0
    %442 = vmatpush2.msra.mxu0 0.0
    %443 = vmatprep.subr.mxu0 0.0
    %444 = vmatpush2.msra.mxu0 0.0
    %445 = vmatprep.mubr.f32.mxu0 0.0
    %446 = vmatmul.mubr.f32.gmra.mxu0 %v379
    %v447 = vpop.f32.mrf.mxu0
    %v448 = vadd.f32 %v372, %v447
    %v449 = vpop.f32.mrf.mxu0
    %450 = vdwg.mxu0
    %v451 = vlaneseq
    %v452 = vshrl.u32 %v451, 7
    %v453 = vsub.s32 1, %v452
    %v454 = vrot.slane %v48, %v453
    %v455 = vadd.f32 %v448, %v454
    %v456 = vadd.f32 %v45, %v455
    %v457 = vsel %vm71, %v456, 0.0
    %458 = vadd.xlane.f32.xlu0 %v457
    %v459 = vpop.xlane.xlu0 %458
    %v460 = vmul.f32 %v456, %v456
    %v461 = vsel %vm71, %v460, 0.0
    %462 = vadd.xlane.f32.xlu0 %v461
    %v463 = vpop.xlane.xlu0 %462
    %v464 = vmul.f32 %v459, 0.03125
    %v465 = vmul.f32 %v463, 0.03125
    %v466 = vmul.f32 %v464, %v464
    %v467 = vsub.f32 %v465, %v466
    %v468 = vsub.f32 %v456, %v464
    %v469 = vadd.f32 %v467, 1e-05
    %v470 = vrsqrt.pop %v469
    %v471 = vmul.f32 %v468, %v470
    %v472 = vlaneseq
    %v473 = vshrl.u32 %v472, 7
    %v474 = vsub.s32 2, %v473
    %v475 = vrot.slane %v48, %v474
    %v476 = vmul.f32 %v471, %v475
    %v477 = vlaneseq
    %v478 = vshrl.u32 %v477, 7
    %v479 = vsub.s32 3, %v478
    %v480 = vrot.slane %v48, %v479
    %v481 = vadd.f32 %v476, %v480
    %v482 = vpack.c.bf16 %v481, %v481
    %v483 = vld [vmem:[%s2] sm:$0xff]
    %v484 = vld [vmem:[%s2 + $0x8] sm:$0xff]
    %v485 = vld [vmem:[%s2 + $0x10] sm:$0xff]
    %v486 = vld [vmem:[%s2 + $0x18] sm:$0xff]
    %v487 = vlaneseq
    %v488 = vshrl.u32 %v487, 7
    %v489 = vsub.s32 4, %v488
    %v490 = vrot.slane %v48, %v489
    %v491 = vlaneseq
    %v492 = vshrl.u32 %v491, 7
    %v493 = vsub.s32 4, %v492
    %v494 = vrot.slane %v49, %v493
    %v499 = vunpack.c.l.b16 %v483
    %v500 = vunpack.c.h.b16 %v483
    %v501 = vunpack.c.l.b16 %v484
    %v502 = vunpack.c.h.b16 %v484
    %v503 = vunpack.c.l.b16 %v485
    %v504 = vunpack.c.h.b16 %v485
    %v505 = vunpack.c.l.b16 %v486
    %v506 = vunpack.c.h.b16 %v486
    %v507 = vpack.c.b16 %v501, %v499
    %v508 = vpack.c.b16 %v502, %v500
    %v509 = vpack.c.b16 %v505, %v503
    %v510 = vpack.c.b16 %v506, %v504
    %v516 = vsel %vm71, %v482, 0
    %518 = vmatprep.subr.bf16.mxu0 0
    %519 = vmatpush1.bf16.msra.mxu0 0
    %520 = vmatprep.subr.bf16.mxu0 0
    %521 = vmatpush1.bf16.msra.mxu0 0
    %522 = vmatprep.subr.bf16.mxu0 0
    %523 = vmatpush1.bf16.msra.mxu0 0
    %524 = vmatprep.subr.bf16.mxu0 0
    %525 = vmatpush1.bf16.msra.mxu0 0
    %526 = vmatprep.subr.bf16.mxu0 0
    %527 = vmatpush1.bf16.msra.mxu0 0
    %528 = vmatprep.subr.bf16.mxu0 0
    %529 = vmatpush1.bf16.msra.mxu0 0
    %530 = vmatprep.subr.bf16.mxu0 %v510
    %531 = vmatpush1.bf16.msra.mxu0 %v509
    %532 = vmatprep.subr.bf16.mxu0 %v508
    %533 = vmatpush1.bf16.msra.mxu0 %v507
    %534 = vmatprep.subr.bf16.mxu0 0
    %535 = vmatpush2.bf16.msra.mxu0 0
    %536 = vmatprep.subr.bf16.mxu0 0
    %537 = vmatpush2.bf16.msra.mxu0 0
    %538 = vmatprep.subr.bf16.mxu0 0
    %539 = vmatpush2.bf16.msra.mxu0 0
    %540 = vmatprep.subr.bf16.mxu0 0
    %541 = vmatpush2.bf16.msra.mxu0 0
    %542 = vmatprep.subr.bf16.mxu0 0
    %543 = vmatpush2.bf16.msra.mxu0 0
    %544 = vmatprep.subr.bf16.mxu0 0
    %545 = vmatpush2.bf16.msra.mxu0 0
    %546 = vmatprep.subr.bf16.mxu0 0
    %547 = vmatpush2.bf16.msra.mxu0 0
    %548 = vmatprep.subr.bf16.mxu0 0
    %549 = vmatpush2.bf16.msra.mxu0 0
    %550 = vmatprep.mubr.bf16.mxu0 0
    %551 = vmatmul.mubr.bf16.gmra.mxu0 %v516
    %v552 = vpop.f32.mrf.mxu0
    %v553 = vadd.f32 %v490, %v552
    %v554 = vpop.f32.mrf.mxu0
    %v555 = vadd.f32 %v494, %v554
    %v556 = vpop.f32.mrf.mxu0
    %v557 = vpop.f32.mrf.mxu0
    %558 = vdwg.mxu0
    %v559 = vmax.f32 %v553, 0.0
    %v560 = vmax.f32 %v555, 0.0
    %v561 = vpack.c.bf16 %v559, %v559
    %v562 = vpack.c.bf16 %v560, %v560
    %v563 = vld [vmem:[%s3] sm:$0xf]
    %v564 = vld [vmem:[%s3 + $0x4] sm:$0xf]
    %v565 = vld [vmem:[%s3 + $0x8] sm:$0xf]
    %v566 = vld [vmem:[%s3 + $0xc] sm:$0xf]
    %v567 = vld [vmem:[%s3 + $0x10] sm:$0xf]
    %v568 = vld [vmem:[%s3 + $0x14] sm:$0xf]
    %v569 = vld [vmem:[%s3 + $0x18] sm:$0xf]
    %v570 = vld [vmem:[%s3 + $0x1c] sm:$0xf]
    %v571 = vld [vmem:[%s3 + $0x20] sm:$0xf]
    %v572 = vld [vmem:[%s3 + $0x24] sm:$0xf]
    %v573 = vld [vmem:[%s3 + $0x28] sm:$0xf]
    %v574 = vld [vmem:[%s3 + $0x2c] sm:$0xf]
    %v575 = vld [vmem:[%s3 + $0x30] sm:$0xf]
    %v576 = vld [vmem:[%s3 + $0x34] sm:$0xf]
    %v577 = vld [vmem:[%s3 + $0x38] sm:$0xf]
    %v578 = vld [vmem:[%s3 + $0x3c] sm:$0xf]
    %v579 = vld [vmem:[%s3 + $0x40] sm:$0xf]
    %v580 = vld [vmem:[%s3 + $0x44] sm:$0xf]
    %v581 = vld [vmem:[%s3 + $0x48] sm:$0xf]
    %v582 = vld [vmem:[%s3 + $0x4c] sm:$0xf]
    %v583 = vld [vmem:[%s3 + $0x50] sm:$0xf]
    %v584 = vld [vmem:[%s3 + $0x54] sm:$0xf]
    %v585 = vld [vmem:[%s3 + $0x58] sm:$0xf]
    %v586 = vld [vmem:[%s3 + $0x5c] sm:$0xf]
    %v587 = vld [vmem:[%s3 + $0x60] sm:$0xf]
    %v588 = vld [vmem:[%s3 + $0x64] sm:$0xf]
    %v589 = vld [vmem:[%s3 + $0x68] sm:$0xf]
    %v590 = vld [vmem:[%s3 + $0x6c] sm:$0xf]
    %v591 = vld [vmem:[%s3 + $0x70] sm:$0xf]
    %v592 = vld [vmem:[%s3 + $0x74] sm:$0xf]
    %v593 = vld [vmem:[%s3 + $0x78] sm:$0xf]
    %v594 = vld [vmem:[%s3 + $0x7c] sm:$0xf]
    %v595 = vlaneseq
    %v596 = vshrl.u32 %v595, 7
    %v597 = vsub.s32 5, %v596
    %v598 = vrot.slane %v48, %v597
    %v631 = vunpack.c.l.b16 %v563
    %v632 = vunpack.c.l.b16 %v564
    %v633 = vunpack.c.l.b16 %v565
    %v634 = vunpack.c.l.b16 %v566
    %v635 = vunpack.c.l.b16 %v567
    %v636 = vunpack.c.l.b16 %v568
    %v637 = vunpack.c.l.b16 %v569
    %v638 = vunpack.c.l.b16 %v570
    %v639 = vunpack.c.l.b16 %v571
    %v640 = vunpack.c.l.b16 %v572
    %v641 = vunpack.c.l.b16 %v573
    %v642 = vunpack.c.l.b16 %v574
    %v643 = vunpack.c.l.b16 %v575
    %v644 = vunpack.c.l.b16 %v576
    %v645 = vunpack.c.l.b16 %v577
    %v646 = vunpack.c.l.b16 %v578
    %v647 = vunpack.c.l.b16 %v579
    %v648 = vunpack.c.l.b16 %v580
    %v649 = vunpack.c.l.b16 %v581
    %v650 = vunpack.c.l.b16 %v582
    %v651 = vunpack.c.l.b16 %v583
    %v652 = vunpack.c.l.b16 %v584
    %v653 = vunpack.c.l.b16 %v585
    %v654 = vunpack.c.l.b16 %v586
    %v655 = vunpack.c.l.b16 %v587
    %v656 = vunpack.c.l.b16 %v588
    %v657 = vunpack.c.l.b16 %v589
    %v658 = vunpack.c.l.b16 %v590
    %v659 = vunpack.c.l.b16 %v591
    %v660 = vunpack.c.l.b16 %v592
    %v661 = vunpack.c.l.b16 %v593
    %v662 = vunpack.c.l.b16 %v594
    %v663 = vpack.c.b16 %v632, %v631
    %v664 = vpack.c.b16 %v634, %v633
    %v665 = vpack.c.b16 %v636, %v635
    %v666 = vpack.c.b16 %v638, %v637
    %v667 = vpack.c.b16 %v640, %v639
    %v668 = vpack.c.b16 %v642, %v641
    %v669 = vpack.c.b16 %v644, %v643
    %v670 = vpack.c.b16 %v646, %v645
    %v671 = vpack.c.b16 %v648, %v647
    %v672 = vpack.c.b16 %v650, %v649
    %v673 = vpack.c.b16 %v652, %v651
    %v674 = vpack.c.b16 %v654, %v653
    %v675 = vpack.c.b16 %v656, %v655
    %v676 = vpack.c.b16 %v658, %v657
    %v677 = vpack.c.b16 %v660, %v659
    %v678 = vpack.c.b16 %v662, %v661
    %695 = vmatprep.subr.bf16.mxu0 0
    %696 = vmatpush1.bf16.msra.mxu0 %v670
    %697 = vmatprep.subr.bf16.mxu0 0
    %698 = vmatpush1.bf16.msra.mxu0 %v669
    %699 = vmatprep.subr.bf16.mxu0 0
    %700 = vmatpush1.bf16.msra.mxu0 %v668
    %701 = vmatprep.subr.bf16.mxu0 0
    %702 = vmatpush1.bf16.msra.mxu0 %v667
    %703 = vmatprep.subr.bf16.mxu0 0
    %704 = vmatpush1.bf16.msra.mxu0 %v666
    %705 = vmatprep.subr.bf16.mxu0 0
    %706 = vmatpush1.bf16.msra.mxu0 %v665
    %707 = vmatprep.subr.bf16.mxu0 0
    %708 = vmatpush1.bf16.msra.mxu0 %v664
    %709 = vmatprep.subr.bf16.mxu0 0
    %710 = vmatpush1.bf16.msra.mxu0 %v663
    %711 = vmatprep.subr.bf16.mxu0 0
    %712 = vmatpush2.bf16.msra.mxu0 %v678
    %713 = vmatprep.subr.bf16.mxu0 0
    %714 = vmatpush2.bf16.msra.mxu0 %v677
    %715 = vmatprep.subr.bf16.mxu0 0
    %716 = vmatpush2.bf16.msra.mxu0 %v676
    %717 = vmatprep.subr.bf16.mxu0 0
    %718 = vmatpush2.bf16.msra.mxu0 %v675
    %719 = vmatprep.subr.bf16.mxu0 0
    %720 = vmatpush2.bf16.msra.mxu0 %v674
    %721 = vmatprep.subr.bf16.mxu0 0
    %722 = vmatpush2.bf16.msra.mxu0 %v673
    %723 = vmatprep.subr.bf16.mxu0 0
    %724 = vmatpush2.bf16.msra.mxu0 %v672
    %725 = vmatprep.subr.bf16.mxu0 0
    %726 = vmatpush2.bf16.msra.mxu0 %v671
    %727 = vmatprep.mubr.bf16.mxu0 %v562
    %728 = vmatmul.mubr.bf16.gmra.mxu0 %v561
    %v729 = vpop.f32.mrf.mxu0
    %v730 = vadd.f32 %v598, %v729
    %v731 = vpop.f32.mrf.mxu0
    %v732 = vpop.f32.mrf.mxu0
    %v733 = vpop.f32.mrf.mxu0
    %734 = vdwg.mxu0
    %v735 = vadd.f32 %v481, %v730
    %v736 = vsel %vm71, %v735, 0.0
    %737 = vadd.xlane.f32.xlu0 %v736
    %v738 = vpop.xlane.xlu0 %737
    %v739 = vmul.f32 %v735, %v735
    %v740 = vsel %vm71, %v739, 0.0
    %741 = vadd.xlane.f32.xlu0 %v740
    %v742 = vpop.xlane.xlu0 %741
    %v743 = vmul.f32 %v738, 0.03125
    %v744 = vmul.f32 %v742, 0.03125
    %v745 = vmul.f32 %v743, %v743
    %v746 = vsub.f32 %v744, %v745
    %v747 = vsub.f32 %v735, %v743
    %v748 = vadd.f32 %v746, 1e-05
    %v749 = vrsqrt.pop %v748
    %v750 = vmul.f32 %v747, %v749
    %v751 = vlaneseq
    %v752 = vshrl.u32 %v751, 7
    %v753 = vsub.s32 6, %v752
    %v754 = vrot.slane %v48, %v753
    %v755 = vmul.f32 %v750, %v754
    %v756 = vlaneseq
    %v757 = vshrl.u32 %v756, 7
    %v758 = vsub.s32 7, %v757
    %v759 = vrot.slane %v48, %v758
    %v760 = vadd.f32 %v755, %v759
    %s761 = scalar_lea.vmem %s4, 16
    %v762 = vld [vmem:[%s761] sm:$0xff]
    %v763 = vld [vmem:[%s761 + $0x8] sm:$0xff]
    %v764 = vpack.c.bf16 %v760, %v760
    %s765 = scalar_lea.vmem %s1, 16
    %v766 = vld [vmem:[%s765] sm:$0xf]
    %v767 = vld [vmem:[%s765 + $0x4] sm:$0xf]
    %v768 = vld [vmem:[%s765 + $0x8] sm:$0xf]
    %v769 = vld [vmem:[%s765 + $0xc] sm:$0xf]
    %v770 = vlaneseq
    %v771 = vshrl.u32 %v770, 7
    %v772 = vsub.s32 0, %v771
    %v773 = vrot.slane %v762, %v772
    %v778 = vunpack.c.l.b16 %v766
    %v779 = vunpack.c.l.b16 %v767
    %v780 = vunpack.c.l.b16 %v768
    %v781 = vunpack.c.l.b16 %v769
    %v782 = vpack.c.b16 %v779, %v778
    %v783 = vpack.c.b16 %v781, %v780
    %v787 = vsel %vm71, %v764, 0
    %789 = vmatprep.subr.bf16.mxu0 0
    %790 = vmatpush1.bf16.msra.mxu0 0
    %791 = vmatprep.subr.bf16.mxu0 0
    %792 = vmatpush1.bf16.msra.mxu0 0
    %793 = vmatprep.subr.bf16.mxu0 0
    %794 = vmatpush1.bf16.msra.mxu0 0
    %795 = vmatprep.subr.bf16.mxu0 0
    %796 = vmatpush1.bf16.msra.mxu0 0
    %797 = vmatprep.subr.bf16.mxu0 0
    %798 = vmatpush1.bf16.msra.mxu0 0
    %799 = vmatprep.subr.bf16.mxu0 0
    %800 = vmatpush1.bf16.msra.mxu0 0
    %801 = vmatprep.subr.bf16.mxu0 0
    %802 = vmatpush1.bf16.msra.mxu0 %v783
    %803 = vmatprep.subr.bf16.mxu0 0
    %804 = vmatpush1.bf16.msra.mxu0 %v782
    %805 = vmatprep.subr.bf16.mxu0 0
    %806 = vmatpush2.bf16.msra.mxu0 0
    %807 = vmatprep.subr.bf16.mxu0 0
    %808 = vmatpush2.bf16.msra.mxu0 0
    %809 = vmatprep.subr.bf16.mxu0 0
    %810 = vmatpush2.bf16.msra.mxu0 0
    %811 = vmatprep.subr.bf16.mxu0 0
    %812 = vmatpush2.bf16.msra.mxu0 0
    %813 = vmatprep.subr.bf16.mxu0 0
    %814 = vmatpush2.bf16.msra.mxu0 0
    %815 = vmatprep.subr.bf16.mxu0 0
    %816 = vmatpush2.bf16.msra.mxu0 0
    %817 = vmatprep.subr.bf16.mxu0 0
    %818 = vmatpush2.bf16.msra.mxu0 0
    %819 = vmatprep.subr.bf16.mxu0 0
    %820 = vmatpush2.bf16.msra.mxu0 0
    %821 = vmatprep.mubr.bf16.mxu0 0
    %822 = vmatmul.mubr.bf16.gmra.mxu0 %v787
    %v823 = vpop.f32.mrf.mxu0
    %v824 = vadd.f32 %v773, %v823
    %v825 = vpop.f32.mrf.mxu0
    %v826 = vpop.f32.mrf.mxu0
    %v827 = vpop.f32.mrf.mxu0
    %828 = vdwg.mxu0
    %v829 = vmul.f32 %v824, %v118
    %831 = vrot.lane.b32.xlu0 %v824, 96
    %v832 = vpop.permute.xlu0 %831
    %v834 = vsel %vm71, %v829, 0
    %v836 = vsel %vm71, %v832, 0
    %838 = vmatprep.subr.mxu0 0.0
    %839 = vmatpush1.xpose.msra.mxu0 0.0
    %840 = vmatprep.subr.mxu0 0.0
    %841 = vmatpush1.xpose.msra.mxu0 0.0
    %842 = vmatprep.subr.mxu0 0.0
    %843 = vmatpush1.xpose.msra.mxu0 0.0
    %844 = vmatprep.subr.mxu0 0.0
    %845 = vmatpush1.xpose.msra.mxu0 0.0
    %846 = vmatprep.subr.mxu0 0.0
    %847 = vmatpush1.xpose.msra.mxu0 0.0
    %848 = vmatprep.subr.mxu0 0.0
    %849 = vmatpush1.xpose.msra.mxu0 0.0
    %850 = vmatprep.subr.mxu0 0.0
    %851 = vmatpush1.xpose.msra.mxu0 0.0
    %852 = vmatprep.subr.mxu0 0.0
    %853 = vmatpush1.xpose.msra.mxu0 0.0
    %854 = vmatprep.subr.mxu0 0.0
    %855 = vmatpush1.xpose.msra.mxu0 0.0
    %856 = vmatprep.subr.mxu0 0.0
    %857 = vmatpush1.xpose.msra.mxu0 0.0
    %858 = vmatprep.subr.mxu0 0.0
    %859 = vmatpush1.xpose.msra.mxu0 0.0
    %860 = vmatprep.subr.mxu0 0.0
    %861 = vmatpush1.xpose.msra.mxu0 0.0
    %862 = vmatprep.subr.mxu0 0.0
    %863 = vmatpush1.xpose.msra.mxu0 0.0
    %864 = vmatprep.subr.mxu0 0.0
    %865 = vmatpush1.xpose.msra.mxu0 0.0
    %866 = vmatprep.subr.mxu0 0.0
    %867 = vmatpush1.xpose.msra.mxu0 0.0
    %868 = vmatprep.subr.mxu0 0.0
    %869 = vmatpush1.xpose.msra.mxu0 %v836
    %870 = vmatprep.subr.mxu0 0.0
    %871 = vmatpush2.xpose.msra.mxu0 0.0
    %872 = vmatprep.subr.mxu0 0.0
    %873 = vmatpush2.xpose.msra.mxu0 0.0
    %874 = vmatprep.subr.mxu0 0.0
    %875 = vmatpush2.xpose.msra.mxu0 0.0
    %876 = vmatprep.subr.mxu0 0.0
    %877 = vmatpush2.xpose.msra.mxu0 0.0
    %878 = vmatprep.subr.mxu0 0.0
    %879 = vmatpush2.xpose.msra.mxu0 0.0
    %880 = vmatprep.subr.mxu0 0.0
    %881 = vmatpush2.xpose.msra.mxu0 0.0
    %882 = vmatprep.subr.mxu0 0.0
    %883 = vmatpush2.xpose.msra.mxu0 0.0
    %884 = vmatprep.subr.mxu0 0.0
    %885 = vmatpush2.xpose.msra.mxu0 0.0
    %886 = vmatprep.subr.mxu0 0.0
    %887 = vmatpush2.xpose.msra.mxu0 0.0
    %888 = vmatprep.subr.mxu0 0.0
    %889 = vmatpush2.xpose.msra.mxu0 0.0
    %890 = vmatprep.subr.mxu0 0.0
    %891 = vmatpush2.xpose.msra.mxu0 0.0
    %892 = vmatprep.subr.mxu0 0.0
    %893 = vmatpush2.xpose.msra.mxu0 0.0
    %894 = vmatprep.subr.mxu0 0.0
    %895 = vmatpush2.xpose.msra.mxu0 0.0
    %896 = vmatprep.subr.mxu0 0.0
    %897 = vmatpush2.xpose.msra.mxu0 0.0
    %898 = vmatprep.subr.mxu0 0.0
    %899 = vmatpush2.xpose.msra.mxu0 0.0
    %900 = vmatprep.subr.mxu0 0.0
    %901 = vmatpush2.xpose.msra.mxu0 0.0
    %902 = vmatprep.mubr.f32.mxu0 0.0
    %903 = vmatmul.mubr.f32.gmra.mxu0 %v834
    %v904 = vpop.f32.mrf.mxu0
    %v905 = vadd.f32 0.0, %v904
    %v906 = vpop.f32.mrf.mxu0
    %907 = vdwg.mxu0
    %v908 = vsel %vm198, %v905, -inf
    %909 = vmax.xlane.f32.xlu0 %v908
    %v910 = vpop.xlane.xlu0 %909
    %v911 = vsub.f32 %v905, %v910
    %v912 = vmul.f32 %v911, 1.442695
    %v913 = vpow.pop %v912
    %v914 = vsel %vm198, %v913, 0.0
    %915 = vadd.xlane.f32.xlu0 %v914
    %v916 = vpop.xlane.xlu0 %915
    %v917 = vrcp.pop %v916
    %v918 = vmul.f32 %v913, %v917
    %v919 = vmul.f32 %v824, %v213
    %v921 = vsel %vm71, %v919, 0
    %923 = vmatprep.subr.mxu0 0.0
    %924 = vmatpush1.xpose.msra.mxu0 0.0
    %925 = vmatprep.subr.mxu0 0.0
    %926 = vmatpush1.xpose.msra.mxu0 0.0
    %927 = vmatprep.subr.mxu0 0.0
    %928 = vmatpush1.xpose.msra.mxu0 0.0
    %929 = vmatprep.subr.mxu0 0.0
    %930 = vmatpush1.xpose.msra.mxu0 0.0
    %931 = vmatprep.subr.mxu0 0.0
    %932 = vmatpush1.xpose.msra.mxu0 0.0
    %933 = vmatprep.subr.mxu0 0.0
    %934 = vmatpush1.xpose.msra.mxu0 0.0
    %935 = vmatprep.subr.mxu0 0.0
    %936 = vmatpush1.xpose.msra.mxu0 0.0
    %937 = vmatprep.subr.mxu0 0.0
    %938 = vmatpush1.xpose.msra.mxu0 0.0
    %939 = vmatprep.subr.mxu0 0.0
    %940 = vmatpush1.xpose.msra.mxu0 0.0
    %941 = vmatprep.subr.mxu0 0.0
    %942 = vmatpush1.xpose.msra.mxu0 0.0
    %943 = vmatprep.subr.mxu0 0.0
    %944 = vmatpush1.xpose.msra.mxu0 0.0
    %945 = vmatprep.subr.mxu0 0.0
    %946 = vmatpush1.xpose.msra.mxu0 0.0
    %947 = vmatprep.subr.mxu0 0.0
    %948 = vmatpush1.xpose.msra.mxu0 0.0
    %949 = vmatprep.subr.mxu0 0.0
    %950 = vmatpush1.xpose.msra.mxu0 0.0
    %951 = vmatprep.subr.mxu0 0.0
    %952 = vmatpush1.xpose.msra.mxu0 0.0
    %953 = vmatprep.subr.mxu0 0.0
    %954 = vmatpush1.xpose.msra.mxu0 %v836
    %955 = vmatprep.subr.mxu0 0.0
    %956 = vmatpush2.xpose.msra.mxu0 0.0
    %957 = vmatprep.subr.mxu0 0.0
    %958 = vmatpush2.xpose.msra.mxu0 0.0
    %959 = vmatprep.subr.mxu0 0.0
    %960 = vmatpush2.xpose.msra.mxu0 0.0
    %961 = vmatprep.subr.mxu0 0.0
    %962 = vmatpush2.xpose.msra.mxu0 0.0
    %963 = vmatprep.subr.mxu0 0.0
    %964 = vmatpush2.xpose.msra.mxu0 0.0
    %965 = vmatprep.subr.mxu0 0.0
    %966 = vmatpush2.xpose.msra.mxu0 0.0
    %967 = vmatprep.subr.mxu0 0.0
    %968 = vmatpush2.xpose.msra.mxu0 0.0
    %969 = vmatprep.subr.mxu0 0.0
    %970 = vmatpush2.xpose.msra.mxu0 0.0
    %971 = vmatprep.subr.mxu0 0.0
    %972 = vmatpush2.xpose.msra.mxu0 0.0
    %973 = vmatprep.subr.mxu0 0.0
    %974 = vmatpush2.xpose.msra.mxu0 0.0
    %975 = vmatprep.subr.mxu0 0.0
    %976 = vmatpush2.xpose.msra.mxu0 0.0
    %977 = vmatprep.subr.mxu0 0.0
    %978 = vmatpush2.xpose.msra.mxu0 0.0
    %979 = vmatprep.subr.mxu0 0.0
    %980 = vmatpush2.xpose.msra.mxu0 0.0
    %981 = vmatprep.subr.mxu0 0.0
    %982 = vmatpush2.xpose.msra.mxu0 0.0
    %983 = vmatprep.subr.mxu0 0.0
    %984 = vmatpush2.xpose.msra.mxu0 0.0
    %985 = vmatprep.subr.mxu0 0.0
    %986 = vmatpush2.xpose.msra.mxu0 0.0
    %987 = vmatprep.mubr.f32.mxu0 0.0
    %988 = vmatmul.mubr.f32.gmra.mxu0 %v921
    %v989 = vpop.f32.mrf.mxu0
    %v990 = vadd.f32 0.0, %v989
    %v991 = vpop.f32.mrf.mxu0
    %992 = vdwg.mxu0
    %v993 = vsel %vm198, %v990, -inf
    %994 = vmax.xlane.f32.xlu0 %v993
    %v995 = vpop.xlane.xlu0 %994
    %v996 = vsub.f32 %v990, %v995
    %v997 = vmul.f32 %v996, 1.442695
    %v998 = vpow.pop %v997
    %v999 = vsel %vm198, %v998, 0.0
    %1000 = vadd.xlane.f32.xlu0 %v999
    %v1001 = vpop.xlane.xlu0 %1000
    %v1002 = vrcp.pop %v1001
    %v1003 = vmul.f32 %v998, %v1002
    %1004 = vrot.lane.b32.xlu0 %v824, 32
    %v1005 = vpop.permute.xlu0 %1004
    %v1008 = vsel %vm198, %v1003, 0
    %1010 = vmatprep.subr.mxu0 0.0
    %1011 = vmatpush1.msra.mxu0 0.0
    %1012 = vmatprep.subr.mxu0 0.0
    %1013 = vmatpush1.msra.mxu0 0.0
    %1014 = vmatprep.subr.mxu0 0.0
    %1015 = vmatpush1.msra.mxu0 0.0
    %1016 = vmatprep.subr.mxu0 0.0
    %1017 = vmatpush1.msra.mxu0 0.0
    %1018 = vmatprep.subr.mxu0 0.0
    %1019 = vmatpush1.msra.mxu0 0.0
    %1020 = vmatprep.subr.mxu0 0.0
    %1021 = vmatpush1.msra.mxu0 0.0
    %1022 = vmatprep.subr.mxu0 0.0
    %1023 = vmatpush1.msra.mxu0 0.0
    %1024 = vmatprep.subr.mxu0 0.0
    %1025 = vmatpush1.msra.mxu0 0.0
    %1026 = vmatprep.subr.mxu0 0.0
    %1027 = vmatpush1.msra.mxu0 0.0
    %1028 = vmatprep.subr.mxu0 0.0
    %1029 = vmatpush1.msra.mxu0 0.0
    %1030 = vmatprep.subr.mxu0 0.0
    %1031 = vmatpush1.msra.mxu0 0.0
    %1032 = vmatprep.subr.mxu0 0.0
    %1033 = vmatpush1.msra.mxu0 0.0
    %1034 = vmatprep.subr.mxu0 0.0
    %1035 = vmatpush1.msra.mxu0 0.0
    %1036 = vmatprep.subr.mxu0 0.0
    %1037 = vmatpush1.msra.mxu0 0.0
    %1038 = vmatprep.subr.mxu0 0.0
    %1039 = vmatpush1.msra.mxu0 0.0
    %1040 = vmatprep.subr.mxu0 0.0
    %1041 = vmatpush1.msra.mxu0 %v1005
    %1042 = vmatprep.subr.mxu0 0.0
    %1043 = vmatpush2.msra.mxu0 0.0
    %1044 = vmatprep.subr.mxu0 0.0
    %1045 = vmatpush2.msra.mxu0 0.0
    %1046 = vmatprep.subr.mxu0 0.0
    %1047 = vmatpush2.msra.mxu0 0.0
    %1048 = vmatprep.subr.mxu0 0.0
    %1049 = vmatpush2.msra.mxu0 0.0
    %1050 = vmatprep.subr.mxu0 0.0
    %1051 = vmatpush2.msra.mxu0 0.0
    %1052 = vmatprep.subr.mxu0 0.0
    %1053 = vmatpush2.msra.mxu0 0.0
    %1054 = vmatprep.subr.mxu0 0.0
    %1055 = vmatpush2.msra.mxu0 0.0
    %1056 = vmatprep.subr.mxu0 0.0
    %1057 = vmatpush2.msra.mxu0 0.0
    %1058 = vmatprep.subr.mxu0 0.0
    %1059 = vmatpush2.msra.mxu0 0.0
    %1060 = vmatprep.subr.mxu0 0.0
    %1061 = vmatpush2.msra.mxu0 0.0
    %1062 = vmatprep.subr.mxu0 0.0
    %1063 = vmatpush2.msra.mxu0 0.0
    %1064 = vmatprep.subr.mxu0 0.0
    %1065 = vmatpush2.msra.mxu0 0.0
    %1066 = vmatprep.subr.mxu0 0.0
    %1067 = vmatpush2.msra.mxu0 0.0
    %1068 = vmatprep.subr.mxu0 0.0
    %1069 = vmatpush2.msra.mxu0 0.0
    %1070 = vmatprep.subr.mxu0 0.0
    %1071 = vmatpush2.msra.mxu0 0.0
    %1072 = vmatprep.subr.mxu0 0.0
    %1073 = vmatpush2.msra.mxu0 0.0
    %1074 = vmatprep.mubr.f32.mxu0 0.0
    %1075 = vmatmul.mubr.f32.gmra.mxu0 %v1008
    %v1076 = vpop.f32.mrf.mxu0
    %v1077 = vadd.f32 0.0, %v1076
    %v1078 = vpop.f32.mrf.mxu0
    %1079 = vdwg.mxu0
    %1080 = vrot.lane.b32.xlu0 %v824, 64
    %v1081 = vpop.permute.xlu0 %1080
    %v1084 = vsel %vm198, %v918, 0
    %1086 = vmatprep.subr.mxu0 0.0
    %1087 = vmatpush1.msra.mxu0 0.0
    %1088 = vmatprep.subr.mxu0 0.0
    %1089 = vmatpush1.msra.mxu0 0.0
    %1090 = vmatprep.subr.mxu0 0.0
    %1091 = vmatpush1.msra.mxu0 0.0
    %1092 = vmatprep.subr.mxu0 0.0
    %1093 = vmatpush1.msra.mxu0 0.0
    %1094 = vmatprep.subr.mxu0 0.0
    %1095 = vmatpush1.msra.mxu0 0.0
    %1096 = vmatprep.subr.mxu0 0.0
    %1097 = vmatpush1.msra.mxu0 0.0
    %1098 = vmatprep.subr.mxu0 0.0
    %1099 = vmatpush1.msra.mxu0 0.0
    %1100 = vmatprep.subr.mxu0 0.0
    %1101 = vmatpush1.msra.mxu0 0.0
    %1102 = vmatprep.subr.mxu0 0.0
    %1103 = vmatpush1.msra.mxu0 0.0
    %1104 = vmatprep.subr.mxu0 0.0
    %1105 = vmatpush1.msra.mxu0 0.0
    %1106 = vmatprep.subr.mxu0 0.0
    %1107 = vmatpush1.msra.mxu0 0.0
    %1108 = vmatprep.subr.mxu0 0.0
    %1109 = vmatpush1.msra.mxu0 0.0
    %1110 = vmatprep.subr.mxu0 0.0
    %1111 = vmatpush1.msra.mxu0 0.0
    %1112 = vmatprep.subr.mxu0 0.0
    %1113 = vmatpush1.msra.mxu0 0.0
    %1114 = vmatprep.subr.mxu0 0.0
    %1115 = vmatpush1.msra.mxu0 0.0
    %1116 = vmatprep.subr.mxu0 0.0
    %1117 = vmatpush1.msra.mxu0 %v1081
    %1118 = vmatprep.subr.mxu0 0.0
    %1119 = vmatpush2.msra.mxu0 0.0
    %1120 = vmatprep.subr.mxu0 0.0
    %1121 = vmatpush2.msra.mxu0 0.0
    %1122 = vmatprep.subr.mxu0 0.0
    %1123 = vmatpush2.msra.mxu0 0.0
    %1124 = vmatprep.subr.mxu0 0.0
    %1125 = vmatpush2.msra.mxu0 0.0
    %1126 = vmatprep.subr.mxu0 0.0
    %1127 = vmatpush2.msra.mxu0 0.0
    %1128 = vmatprep.subr.mxu0 0.0
    %1129 = vmatpush2.msra.mxu0 0.0
    %1130 = vmatprep.subr.mxu0 0.0
    %1131 = vmatpush2.msra.mxu0 0.0
    %1132 = vmatprep.subr.mxu0 0.0
    %1133 = vmatpush2.msra.mxu0 0.0
    %1134 = vmatprep.subr.mxu0 0.0
    %1135 = vmatpush2.msra.mxu0 0.0
    %1136 = vmatprep.subr.mxu0 0.0
    %1137 = vmatpush2.msra.mxu0 0.0
    %1138 = vmatprep.subr.mxu0 0.0
    %1139 = vmatpush2.msra.mxu0 0.0
    %1140 = vmatprep.subr.mxu0 0.0
    %1141 = vmatpush2.msra.mxu0 0.0
    %1142 = vmatprep.subr.mxu0 0.0
    %1143 = vmatpush2.msra.mxu0 0.0
    %1144 = vmatprep.subr.mxu0 0.0
    %1145 = vmatpush2.msra.mxu0 0.0
    %1146 = vmatprep.subr.mxu0 0.0
    %1147 = vmatpush2.msra.mxu0 0.0
    %1148 = vmatprep.subr.mxu0 0.0
    %1149 = vmatpush2.msra.mxu0 0.0
    %1150 = vmatprep.mubr.f32.mxu0 0.0
    %1151 = vmatmul.mubr.f32.gmra.mxu0 %v1084
    %v1152 = vpop.f32.mrf.mxu0
    %v1153 = vadd.f32 %v1077, %v1152
    %v1154 = vpop.f32.mrf.mxu0
    %1155 = vdwg.mxu0
    %v1156 = vlaneseq
    %v1157 = vshrl.u32 %v1156, 7
    %v1158 = vsub.s32 1, %v1157
    %v1159 = vrot.slane %v762, %v1158
    %v1160 = vadd.f32 %v1153, %v1159
    %v1161 = vadd.f32 %v760, %v1160
    %v1162 = vsel %vm71, %v1161, 0.0
    %1163 = vadd.xlane.f32.xlu0 %v1162
    %v1164 = vpop.xlane.xlu0 %1163
    %v1165 = vmul.f32 %v1161, %v1161
    %v1166 = vsel %vm71, %v1165, 0.0
    %1167 = vadd.xlane.f32.xlu0 %v1166
    %v1168 = vpop.xlane.xlu0 %1167
    %v1169 = vmul.f32 %v1164, 0.03125
    %v1170 = vmul.f32 %v1168, 0.03125
    %v1171 = vmul.f32 %v1169, %v1169
    %v1172 = vsub.f32 %v1170, %v1171
    %v1173 = vsub.f32 %v1161, %v1169
    %v1174 = vadd.f32 %v1172, 1e-05
    %v1175 = vrsqrt.pop %v1174
    %v1176 = vmul.f32 %v1173, %v1175
    %v1177 = vlaneseq
    %v1178 = vshrl.u32 %v1177, 7
    %v1179 = vsub.s32 2, %v1178
    %v1180 = vrot.slane %v762, %v1179
    %v1181 = vmul.f32 %v1176, %v1180
    %v1182 = vlaneseq
    %v1183 = vshrl.u32 %v1182, 7
    %v1184 = vsub.s32 3, %v1183
    %v1185 = vrot.slane %v762, %v1184
    %v1186 = vadd.f32 %v1181, %v1185
    %v1187 = vpack.c.bf16 %v1186, %v1186
    %s1188 = scalar_lea.vmem %s2, 32
    %v1189 = vld [vmem:[%s1188] sm:$0xff]
    %v1190 = vld [vmem:[%s1188 + $0x8] sm:$0xff]
    %v1191 = vld [vmem:[%s1188 + $0x10] sm:$0xff]
    %v1192 = vld [vmem:[%s1188 + $0x18] sm:$0xff]
    %v1193 = vlaneseq
    %v1194 = vshrl.u32 %v1193, 7
    %v1195 = vsub.s32 4, %v1194
    %v1196 = vrot.slane %v762, %v1195
    %v1197 = vlaneseq
    %v1198 = vshrl.u32 %v1197, 7
    %v1199 = vsub.s32 4, %v1198
    %v1200 = vrot.slane %v763, %v1199
    %v1205 = vunpack.c.l.b16 %v1189
    %v1206 = vunpack.c.h.b16 %v1189
    %v1207 = vunpack.c.l.b16 %v1190
    %v1208 = vunpack.c.h.b16 %v1190
    %v1209 = vunpack.c.l.b16 %v1191
    %v1210 = vunpack.c.h.b16 %v1191
    %v1211 = vunpack.c.l.b16 %v1192
    %v1212 = vunpack.c.h.b16 %v1192
    %v1213 = vpack.c.b16 %v1207, %v1205
    %v1214 = vpack.c.b16 %v1208, %v1206
    %v1215 = vpack.c.b16 %v1211, %v1209
    %v1216 = vpack.c.b16 %v1212, %v1210
    %v1222 = vsel %vm71, %v1187, 0
    %1224 = vmatprep.subr.bf16.mxu0 0
    %1225 = vmatpush1.bf16.msra.mxu0 0
    %1226 = vmatprep.subr.bf16.mxu0 0
    %1227 = vmatpush1.bf16.msra.mxu0 0
    %1228 = vmatprep.subr.bf16.mxu0 0
    %1229 = vmatpush1.bf16.msra.mxu0 0
    %1230 = vmatprep.subr.bf16.mxu0 0
    %1231 = vmatpush1.bf16.msra.mxu0 0
    %1232 = vmatprep.subr.bf16.mxu0 0
    %1233 = vmatpush1.bf16.msra.mxu0 0
    %1234 = vmatprep.subr.bf16.mxu0 0
    %1235 = vmatpush1.bf16.msra.mxu0 0
    %1236 = vmatprep.subr.bf16.mxu0 %v1216
    %1237 = vmatpush1.bf16.msra.mxu0 %v1215
    %1238 = vmatprep.subr.bf16.mxu0 %v1214
    %1239 = vmatpush1.bf16.msra.mxu0 %v1213
    %1240 = vmatprep.subr.bf16.mxu0 0
    %1241 = vmatpush2.bf16.msra.mxu0 0
    %1242 = vmatprep.subr.bf16.mxu0 0
    %1243 = vmatpush2.bf16.msra.mxu0 0
    %1244 = vmatprep.subr.bf16.mxu0 0
    %1245 = vmatpush2.bf16.msra.mxu0 0
    %1246 = vmatprep.subr.bf16.mxu0 0
    %1247 = vmatpush2.bf16.msra.mxu0 0
    %1248 = vmatprep.subr.bf16.mxu0 0
    %1249 = vmatpush2.bf16.msra.mxu0 0
    %1250 = vmatprep.subr.bf16.mxu0 0
    %1251 = vmatpush2.bf16.msra.mxu0 0
    %1252 = vmatprep.subr.bf16.mxu0 0
    %1253 = vmatpush2.bf16.msra.mxu0 0
    %1254 = vmatprep.subr.bf16.mxu0 0
    %1255 = vmatpush2.bf16.msra.mxu0 0
    %1256 = vmatprep.mubr.bf16.mxu0 0
    %1257 = vmatmul.mubr.bf16.gmra.mxu0 %v1222
    %v1258 = vpop.f32.mrf.mxu0
    %v1259 = vadd.f32 %v1196, %v1258
    %v1260 = vpop.f32.mrf.mxu0
    %v1261 = vadd.f32 %v1200, %v1260
    %v1262 = vpop.f32.mrf.mxu0
    %v1263 = vpop.f32.mrf.mxu0
    %1264 = vdwg.mxu0
    %v1265 = vmax.f32 %v1259, 0.0
    %v1266 = vmax.f32 %v1261, 0.0
    %v1267 = vpack.c.bf16 %v1265, %v1265
    %v1268 = vpack.c.bf16 %v1266, %v1266
    %s1269 = scalar_lea.vmem %s3, 128
    %v1270 = vld [vmem:[%s1269] sm:$0xf]
    %v1271 = vld [vmem:[%s1269 + $0x4] sm:$0xf]
    %v1272 = vld [vmem:[%s1269 + $0x8] sm:$0xf]
    %v1273 = vld [vmem:[%s1269 + $0xc] sm:$0xf]
    %v1274 = vld [vmem:[%s1269 + $0x10] sm:$0xf]
    %v1275 = vld [vmem:[%s1269 + $0x14] sm:$0xf]
    %v1276 = vld [vmem:[%s1269 + $0x18] sm:$0xf]
    %v1277 = vld [vmem:[%s1269 + $0x1c] sm:$0xf]
    %v1278 = vld [vmem:[%s1269 + $0x20] sm:$0xf]
    %v1279 = vld [vmem:[%s1269 + $0x24] sm:$0xf]
    %v1280 = vld [vmem:[%s1269 + $0x28] sm:$0xf]
    %v1281 = vld [vmem:[%s1269 + $0x2c] sm:$0xf]
    %v1282 = vld [vmem:[%s1269 + $0x30] sm:$0xf]
    %v1283 = vld [vmem:[%s1269 + $0x34] sm:$0xf]
    %v1284 = vld [vmem:[%s1269 + $0x38] sm:$0xf]
    %v1285 = vld [vmem:[%s1269 + $0x3c] sm:$0xf]
    %v1286 = vld [vmem:[%s1269 + $0x40] sm:$0xf]
    %v1287 = vld [vmem:[%s1269 + $0x44] sm:$0xf]
    %v1288 = vld [vmem:[%s1269 + $0x48] sm:$0xf]
    %v1289 = vld [vmem:[%s1269 + $0x4c] sm:$0xf]
    %v1290 = vld [vmem:[%s1269 + $0x50] sm:$0xf]
    %v1291 = vld [vmem:[%s1269 + $0x54] sm:$0xf]
    %v1292 = vld [vmem:[%s1269 + $0x58] sm:$0xf]
    %v1293 = vld [vmem:[%s1269 + $0x5c] sm:$0xf]
    %v1294 = vld [vmem:[%s1269 + $0x60] sm:$0xf]
    %v1295 = vld [vmem:[%s1269 + $0x64] sm:$0xf]
    %v1296 = vld [vmem:[%s1269 + $0x68] sm:$0xf]
    %v1297 = vld [vmem:[%s1269 + $0x6c] sm:$0xf]
    %v1298 = vld [vmem:[%s1269 + $0x70] sm:$0xf]
    %v1299 = vld [vmem:[%s1269 + $0x74] sm:$0xf]
    %v1300 = vld [vmem:[%s1269 + $0x78] sm:$0xf]
    %v1301 = vld [vmem:[%s1269 + $0x7c] sm:$0xf]
    %v1302 = vlaneseq
    %v1303 = vshrl.u32 %v1302, 7
    %v1304 = vsub.s32 5, %v1303
    %v1305 = vrot.slane %v762, %v1304
    %v1338 = vunpack.c.l.b16 %v1270
    %v1339 = vunpack.c.l.b16 %v1271
    %v1340 = vunpack.c.l.b16 %v1272
    %v1341 = vunpack.c.l.b16 %v1273
    %v1342 = vunpack.c.l.b16 %v1274
    %v1343 = vunpack.c.l.b16 %v1275
    %v1344 = vunpack.c.l.b16 %v1276
    %v1345 = vunpack.c.l.b16 %v1277
    %v1346 = vunpack.c.l.b16 %v1278
    %v1347 = vunpack.c.l.b16 %v1279
    %v1348 = vunpack.c.l.b16 %v1280
    %v1349 = vunpack.c.l.b16 %v1281
    %v1350 = vunpack.c.l.b16 %v1282
    %v1351 = vunpack.c.l.b16 %v1283
    %v1352 = vunpack.c.l.b16 %v1284
    %v1353 = vunpack.c.l.b16 %v1285
    %v1354 = vunpack.c.l.b16 %v1286
    %v1355 = vunpack.c.l.b16 %v1287
    %v1356 = vunpack.c.l.b16 %v1288
    %v1357 = vunpack.c.l.b16 %v1289
    %v1358 = vunpack.c.l.b16 %v1290
    %v1359 = vunpack.c.l.b16 %v1291
    %v1360 = vunpack.c.l.b16 %v1292
    %v1361 = vunpack.c.l.b16 %v1293
    %v1362 = vunpack.c.l.b16 %v1294
    %v1363 = vunpack.c.l.b16 %v1295
    %v1364 = vunpack.c.l.b16 %v1296
    %v1365 = vunpack.c.l.b16 %v1297
    %v1366 = vunpack.c.l.b16 %v1298
    %v1367 = vunpack.c.l.b16 %v1299
    %v1368 = vunpack.c.l.b16 %v1300
    %v1369 = vunpack.c.l.b16 %v1301
    %v1370 = vpack.c.b16 %v1339, %v1338
    %v1371 = vpack.c.b16 %v1341, %v1340
    %v1372 = vpack.c.b16 %v1343, %v1342
    %v1373 = vpack.c.b16 %v1345, %v1344
    %v1374 = vpack.c.b16 %v1347, %v1346
    %v1375 = vpack.c.b16 %v1349, %v1348
    %v1376 = vpack.c.b16 %v1351, %v1350
    %v1377 = vpack.c.b16 %v1353, %v1352
    %v1378 = vpack.c.b16 %v1355, %v1354
    %v1379 = vpack.c.b16 %v1357, %v1356
    %v1380 = vpack.c.b16 %v1359, %v1358
    %v1381 = vpack.c.b16 %v1361, %v1360
    %v1382 = vpack.c.b16 %v1363, %v1362
    %v1383 = vpack.c.b16 %v1365, %v1364
    %v1384 = vpack.c.b16 %v1367, %v1366
    %v1385 = vpack.c.b16 %v1369, %v1368
    %1402 = vmatprep.subr.bf16.mxu0 0
    %1403 = vmatpush1.bf16.msra.mxu0 %v1377
    %1404 = vmatprep.subr.bf16.mxu0 0
    %1405 = vmatpush1.bf16.msra.mxu0 %v1376
    %1406 = vmatprep.subr.bf16.mxu0 0
    %1407 = vmatpush1.bf16.msra.mxu0 %v1375
    %1408 = vmatprep.subr.bf16.mxu0 0
    %1409 = vmatpush1.bf16.msra.mxu0 %v1374
    %1410 = vmatprep.subr.bf16.mxu0 0
    %1411 = vmatpush1.bf16.msra.mxu0 %v1373
    %1412 = vmatprep.subr.bf16.mxu0 0
    %1413 = vmatpush1.bf16.msra.mxu0 %v1372
    %1414 = vmatprep.subr.bf16.mxu0 0
    %1415 = vmatpush1.bf16.msra.mxu0 %v1371
    %1416 = vmatprep.subr.bf16.mxu0 0
    %1417 = vmatpush1.bf16.msra.mxu0 %v1370
    %1418 = vmatprep.subr.bf16.mxu0 0
    %1419 = vmatpush2.bf16.msra.mxu0 %v1385
    %1420 = vmatprep.subr.bf16.mxu0 0
    %1421 = vmatpush2.bf16.msra.mxu0 %v1384
    %1422 = vmatprep.subr.bf16.mxu0 0
    %1423 = vmatpush2.bf16.msra.mxu0 %v1383
    %1424 = vmatprep.subr.bf16.mxu0 0
    %1425 = vmatpush2.bf16.msra.mxu0 %v1382
    %1426 = vmatprep.subr.bf16.mxu0 0
    %1427 = vmatpush2.bf16.msra.mxu0 %v1381
    %1428 = vmatprep.subr.bf16.mxu0 0
    %1429 = vmatpush2.bf16.msra.mxu0 %v1380
    %1430 = vmatprep.subr.bf16.mxu0 0
    %1431 = vmatpush2.bf16.msra.mxu0 %v1379
    %1432 = vmatprep.subr.bf16.mxu0 0
    %1433 = vmatpush2.bf16.msra.mxu0 %v1378
    %1434 = vmatprep.mubr.bf16.mxu0 %v1268
    %1435 = vmatmul.mubr.bf16.gmra.mxu0 %v1267
    %v1436 = vpop.f32.mrf.mxu0
    %v1437 = vadd.f32 %v1305, %v1436
    %v1438 = vpop.f32.mrf.mxu0
    %v1439 = vpop.f32.mrf.mxu0
    %v1440 = vpop.f32.mrf.mxu0
    %1441 = vdwg.mxu0
    %v1442 = vadd.f32 %v1186, %v1437
    %v1443 = vsel %vm71, %v1442, 0.0
    %1444 = vadd.xlane.f32.xlu0 %v1443
    %v1445 = vpop.xlane.xlu0 %1444
    %v1446 = vmul.f32 %v1442, %v1442
    %v1447 = vsel %vm71, %v1446, 0.0
    %1448 = vadd.xlane.f32.xlu0 %v1447
    %v1449 = vpop.xlane.xlu0 %1448
    %v1450 = vmul.f32 %v1445, 0.03125
    %v1451 = vmul.f32 %v1449, 0.03125
    %v1452 = vmul.f32 %v1450, %v1450
    %v1453 = vsub.f32 %v1451, %v1452
    %v1454 = vsub.f32 %v1442, %v1450
    %v1455 = vadd.f32 %v1453, 1e-05
    %v1456 = vrsqrt.pop %v1455
    %v1457 = vmul.f32 %v1454, %v1456
    %v1458 = vld [vmem:[%s7] sm:$0xff]
    %v1459 = vld [vmem:[%s7 + $0x8] sm:$0xff]
    %v1460 = vpack.c.bf16 %v1457, %v1457
    %v1461 = vld [vmem:[%s5] sm:$0xff]
    %v1462 = vld [vmem:[%s5 + $0x8] sm:$0xff]
    %v1463 = vld [vmem:[%s5 + $0x10] sm:$0xff]
    %v1464 = vld [vmem:[%s5 + $0x18] sm:$0xff]
    %v1465 = vld [vmem:[%s5 + $0x20] sm:$0xff]
    %v1466 = vld [vmem:[%s5 + $0x28] sm:$0xff]
    %v1467 = vld [vmem:[%s5 + $0x30] sm:$0xff]
    %v1468 = vld [vmem:[%s5 + $0x38] sm:$0xff]
    %v1469 = vld [vmem:[%s5 + $0x40] sm:$0xff]
    %v1470 = vld [vmem:[%s5 + $0x48] sm:$0xff]
    %v1471 = vld [vmem:[%s5 + $0x50] sm:$0xff]
    %v1472 = vld [vmem:[%s5 + $0x58] sm:$0xff]
    %v1473 = vld [vmem:[%s5 + $0x60] sm:$0xff]
    %v1474 = vld [vmem:[%s5 + $0x68] sm:$0xff]
    %v1475 = vld [vmem:[%s5 + $0x70] sm:$0xff]
    %v1476 = vld [vmem:[%s5 + $0x78] sm:$0xff]
    %v1479 = vlaneseq
    %v1480 = vshrl.u32 %v1479, 7
    %v1481 = vsub.s32 0, %v1480
    %v1482 = vrot.slane %v1458, %v1481
    %v1483 = vlaneseq
    %v1484 = vshrl.u32 %v1483, 7
    %v1485 = vsub.s32 2, %v1484
    %v1486 = vrot.slane %v1458, %v1485
    %v1487 = vlaneseq
    %v1488 = vshrl.u32 %v1487, 7
    %v1489 = vsub.s32 4, %v1488
    %v1490 = vrot.slane %v1458, %v1489
    %v1491 = vlaneseq
    %v1492 = vshrl.u32 %v1491, 7
    %v1493 = vsub.s32 6, %v1492
    %v1494 = vrot.slane %v1458, %v1493
    %v1495 = vlaneseq
    %v1496 = vshrl.u32 %v1495, 7
    %v1497 = vsub.s32 0, %v1496
    %v1498 = vrot.slane %v1459, %v1497
    %v1499 = vlaneseq
    %v1500 = vshrl.u32 %v1499, 7
    %v1501 = vsub.s32 2, %v1500
    %v1502 = vrot.slane %v1459, %v1501
    %v1503 = vlaneseq
    %v1504 = vshrl.u32 %v1503, 7
    %v1505 = vsub.s32 4, %v1504
    %v1506 = vrot.slane %v1459, %v1505
    %v1507 = vlaneseq
    %v1508 = vshrl.u32 %v1507, 7
    %v1509 = vsub.s32 6, %v1508
    %v1510 = vrot.slane %v1459, %v1509
    %v1519 = vlaneseq
    %v1520 = vshrl.u32 %v1519, 7
    %v1521 = vsub.s32 0, %v1520
    %v1522 = vrot.slane %v1482, %v1521
    %v1523 = vlaneseq
    %v1524 = vshrl.u32 %v1523, 7
    %v1525 = vsub.s32 0, %v1524
    %v1526 = vrot.slane %v1486, %v1525
    %v1527 = vlaneseq
    %v1528 = vshrl.u32 %v1527, 7
    %v1529 = vsub.s32 0, %v1528
    %v1530 = vrot.slane %v1490, %v1529
    %v1531 = vlaneseq
    %v1532 = vshrl.u32 %v1531, 7
    %v1533 = vsub.s32 0, %v1532
    %v1534 = vrot.slane %v1494, %v1533
    %v1535 = vlaneseq
    %v1536 = vshrl.u32 %v1535, 7
    %v1537 = vsub.s32 0, %v1536
    %v1538 = vrot.slane %v1498, %v1537
    %v1539 = vlaneseq
    %v1540 = vshrl.u32 %v1539, 7
    %v1541 = vsub.s32 0, %v1540
    %v1542 = vrot.slane %v1502, %v1541
    %v1543 = vlaneseq
    %v1544 = vshrl.u32 %v1543, 7
    %v1545 = vsub.s32 0, %v1544
    %v1546 = vrot.slane %v1506, %v1545
    %v1547 = vlaneseq
    %v1548 = vshrl.u32 %v1547, 7
    %v1549 = vsub.s32 0, %v1548
    %v1550 = vrot.slane %v1510, %v1549
    %v1567 = vunpack.c.l.b16 %v1461
    %v1568 = vunpack.c.h.b16 %v1461
    %v1569 = vunpack.c.l.b16 %v1462
    %v1570 = vunpack.c.h.b16 %v1462
    %v1571 = vunpack.c.l.b16 %v1463
    %v1572 = vunpack.c.h.b16 %v1463
    %v1573 = vunpack.c.l.b16 %v1464
    %v1574 = vunpack.c.h.b16 %v1464
    %v1575 = vunpack.c.l.b16 %v1465
    %v1576 = vunpack.c.h.b16 %v1465
    %v1577 = vunpack.c.l.b16 %v1466
    %v1578 = vunpack.c.h.b16 %v1466
    %v1579 = vunpack.c.l.b16 %v1467
    %v1580 = vunpack.c.h.b16 %v1467
    %v1581 = vunpack.c.l.b16 %v1468
    %v1582 = vunpack.c.h.b16 %v1468
    %v1583 = vunpack.c.l.b16 %v1469
    %v1584 = vunpack.c.h.b16 %v1469
    %v1585 = vunpack.c.l.b16 %v1470
    %v1586 = vunpack.c.h.b16 %v1470
    %v1587 = vunpack.c.l.b16 %v1471
    %v1588 = vunpack.c.h.b16 %v1471
    %v1589 = vunpack.c.l.b16 %v1472
    %v1590 = vunpack.c.h.b16 %v1472
    %v1591 = vunpack.c.l.b16 %v1473
    %v1592 = vunpack.c.h.b16 %v1473
    %v1593 = vunpack.c.l.b16 %v1474
    %v1594 = vunpack.c.h.b16 %v1474
    %v1595 = vunpack.c.l.b16 %v1475
    %v1596 = vunpack.c.h.b16 %v1475
    %v1597 = vunpack.c.l.b16 %v1476
    %v1598 = vunpack.c.h.b16 %v1476
    %v1599 = vpack.c.b16 %v1575, %v1567
    %v1600 = vpack.c.b16 %v1576, %v1568
    %v1601 = vpack.c.b16 %v1577, %v1569
    %v1602 = vpack.c.b16 %v1578, %v1570
    %v1603 = vpack.c.b16 %v1579, %v1571
    %v1604 = vpack.c.b16 %v1580, %v1572
    %v1605 = vpack.c.b16 %v1581, %v1573
    %v1606 = vpack.c.b16 %v1582, %v1574
    %v1607 = vpack.c.b16 %v1591, %v1583
    %v1608 = vpack.c.b16 %v1592, %v1584
    %v1609 = vpack.c.b16 %v1593, %v1585
    %v1610 = vpack.c.b16 %v1594, %v1586
    %v1611 = vpack.c.b16 %v1595, %v1587
    %v1612 = vpack.c.b16 %v1596, %v1588
    %v1613 = vpack.c.b16 %v1597, %v1589
    %v1614 = vpack.c.b16 %v1598, %v1590
    %v1632 = vsel %vm71, %v1460, 0
    %1634 = vmatprep.subr.bf16.mxu0 0
    %1635 = vmatpush1.bf16.msra.mxu0 0
    %1636 = vmatprep.subr.bf16.mxu0 0
    %1637 = vmatpush1.bf16.msra.mxu0 0
    %1638 = vmatprep.subr.bf16.mxu0 0
    %1639 = vmatpush1.bf16.msra.mxu0 0
    %1640 = vmatprep.subr.bf16.mxu0 0
    %1641 = vmatpush1.bf16.msra.mxu0 0
    %1642 = vmatprep.subr.bf16.mxu0 0
    %1643 = vmatpush1.bf16.msra.mxu0 0
    %1644 = vmatprep.subr.bf16.mxu0 0
    %1645 = vmatpush1.bf16.msra.mxu0 0
    %1646 = vmatprep.subr.bf16.mxu0 %v1608
    %1647 = vmatpush1.bf16.msra.mxu0 %v1607
    %1648 = vmatprep.subr.bf16.mxu0 %v1600
    %1649 = vmatpush1.bf16.msra.mxu0 %v1599
    %1650 = vmatprep.subr.bf16.mxu0 0
    %1651 = vmatpush2.bf16.msra.mxu0 0
    %1652 = vmatprep.subr.bf16.mxu0 0
    %1653 = vmatpush2.bf16.msra.mxu0 0
    %1654 = vmatprep.subr.bf16.mxu0 0
    %1655 = vmatpush2.bf16.msra.mxu0 0
    %1656 = vmatprep.subr.bf16.mxu0 0
    %1657 = vmatpush2.bf16.msra.mxu0 0
    %1658 = vmatprep.subr.bf16.mxu0 0
    %1659 = vmatpush2.bf16.msra.mxu0 0
    %1660 = vmatprep.subr.bf16.mxu0 0
    %1661 = vmatpush2.bf16.msra.mxu0 0
    %1662 = vmatprep.subr.bf16.mxu0 0
    %1663 = vmatpush2.bf16.msra.mxu0 0
    %1664 = vmatprep.subr.bf16.mxu0 0
    %1665 = vmatpush2.bf16.msra.mxu0 0
    %1666 = vmatprep.mubr.bf16.mxu0 0
    %1667 = vmatmul.mubr.bf16.gmra.mxu0 %v1632
    %v1668 = vpop.f32.mrf.mxu0
    %v1669 = vadd.f32 %v1522, %v1668
    %v1670 = vpop.f32.mrf.mxu0
    %v1671 = vadd.f32 %v1526, %v1670
    %v1672 = vpop.f32.mrf.mxu0
    %v1673 = vpop.f32.mrf.mxu0
    %1674 = vdwg.mxu0
    %1675 = vmatprep.subr.bf16.mxu0 0
    %1676 = vmatpush1.bf16.msra.mxu0 0
    %1677 = vmatprep.subr.bf16.mxu0 0
    %1678 = vmatpush1.bf16.msra.mxu0 0
    %1679 = vmatprep.subr.bf16.mxu0 0
    %1680 = vmatpush1.bf16.msra.mxu0 0
    %1681 = vmatprep.subr.bf16.mxu0 0
    %1682 = vmatpush1.bf16.msra.mxu0 0
    %1683 = vmatprep.subr.bf16.mxu0 0
    %1684 = vmatpush1.bf16.msra.mxu0 0
    %1685 = vmatprep.subr.bf16.mxu0 0
    %1686 = vmatpush1.bf16.msra.mxu0 0
    %1687 = vmatprep.subr.bf16.mxu0 %v1610
    %1688 = vmatpush1.bf16.msra.mxu0 %v1609
    %1689 = vmatprep.subr.bf16.mxu0 %v1602
    %1690 = vmatpush1.bf16.msra.mxu0 %v1601
    %1691 = vmatprep.subr.bf16.mxu0 0
    %1692 = vmatpush2.bf16.msra.mxu0 0
    %1693 = vmatprep.subr.bf16.mxu0 0
    %1694 = vmatpush2.bf16.msra.mxu0 0
    %1695 = vmatprep.subr.bf16.mxu0 0
    %1696 = vmatpush2.bf16.msra.mxu0 0
    %1697 = vmatprep.subr.bf16.mxu0 0
    %1698 = vmatpush2.bf16.msra.mxu0 0
    %1699 = vmatprep.subr.bf16.mxu0 0
    %1700 = vmatpush2.bf16.msra.mxu0 0
    %1701 = vmatprep.subr.bf16.mxu0 0
    %1702 = vmatpush2.bf16.msra.mxu0 0
    %1703 = vmatprep.subr.bf16.mxu0 0
    %1704 = vmatpush2.bf16.msra.mxu0 0
    %1705 = vmatprep.subr.bf16.mxu0 0
    %1706 = vmatpush2.bf16.msra.mxu0 0
    %1707 = vmatprep.mubr.bf16.mxu0 0
    %1708 = vmatmul.mubr.bf16.gmra.mxu0 %v1632
    %v1709 = vpop.f32.mrf.mxu0
    %v1710 = vadd.f32 %v1530, %v1709
    %v1711 = vpop.f32.mrf.mxu0
    %v1712 = vadd.f32 %v1534, %v1711
    %v1713 = vpop.f32.mrf.mxu0
    %v1714 = vpop.f32.mrf.mxu0
    %1715 = vdwg.mxu0
    %1716 = vmatprep.subr.bf16.mxu0 0
    %1717 = vmatpush1.bf16.msra.mxu0 0
    %1718 = vmatprep.subr.bf16.mxu0 0
    %1719 = vmatpush1.bf16.msra.mxu0 0
    %1720 = vmatprep.subr.bf16.mxu0 0
    %1721 = vmatpush1.bf16.msra.mxu0 0
    %1722 = vmatprep.subr.bf16.mxu0 0
    %1723 = vmatpush1.bf16.msra.mxu0 0
    %1724 = vmatprep.subr.bf16.mxu0 0
    %1725 = vmatpush1.bf16.msra.mxu0 0
    %1726 = vmatprep.subr.bf16.mxu0 0
    %1727 = vmatpush1.bf16.msra.mxu0 0
    %1728 = vmatprep.subr.bf16.mxu0 %v1612
    %1729 = vmatpush1.bf16.msra.mxu0 %v1611
    %1730 = vmatprep.subr.bf16.mxu0 %v1604
    %1731 = vmatpush1.bf16.msra.mxu0 %v1603
    %1732 = vmatprep.subr.bf16.mxu0 0
    %1733 = vmatpush2.bf16.msra.mxu0 0
    %1734 = vmatprep.subr.bf16.mxu0 0
    %1735 = vmatpush2.bf16.msra.mxu0 0
    %1736 = vmatprep.subr.bf16.mxu0 0
    %1737 = vmatpush2.bf16.msra.mxu0 0
    %1738 = vmatprep.subr.bf16.mxu0 0
    %1739 = vmatpush2.bf16.msra.mxu0 0
    %1740 = vmatprep.subr.bf16.mxu0 0
    %1741 = vmatpush2.bf16.msra.mxu0 0
    %1742 = vmatprep.subr.bf16.mxu0 0
    %1743 = vmatpush2.bf16.msra.mxu0 0
    %1744 = vmatprep.subr.bf16.mxu0 0
    %1745 = vmatpush2.bf16.msra.mxu0 0
    %1746 = vmatprep.subr.bf16.mxu0 0
    %1747 = vmatpush2.bf16.msra.mxu0 0
    %1748 = vmatprep.mubr.bf16.mxu0 0
    %1749 = vmatmul.mubr.bf16.gmra.mxu0 %v1632
    %v1750 = vpop.f32.mrf.mxu0
    %v1751 = vadd.f32 %v1538, %v1750
    %v1752 = vpop.f32.mrf.mxu0
    %v1753 = vadd.f32 %v1542, %v1752
    %v1754 = vpop.f32.mrf.mxu0
    %v1755 = vpop.f32.mrf.mxu0
    %1756 = vdwg.mxu0
    %1757 = vmatprep.subr.bf16.mxu0 0
    %1758 = vmatpush1.bf16.msra.mxu0 0
    %1759 = vmatprep.subr.bf16.mxu0 0
    %1760 = vmatpush1.bf16.msra.mxu0 0
    %1761 = vmatprep.subr.bf16.mxu0 0
    %1762 = vmatpush1.bf16.msra.mxu0 0
    %1763 = vmatprep.subr.bf16.mxu0 0
    %1764 = vmatpush1.bf16.msra.mxu0 0
    %1765 = vmatprep.subr.bf16.mxu0 0
    %1766 = vmatpush1.bf16.msra.mxu0 0
    %1767 = vmatprep.subr.bf16.mxu0 0
    %1768 = vmatpush1.bf16.msra.mxu0 0
    %1769 = vmatprep.subr.bf16.mxu0 %v1614
    %1770 = vmatpush1.bf16.msra.mxu0 %v1613
    %1771 = vmatprep.subr.bf16.mxu0 %v1606
    %1772 = vmatpush1.bf16.msra.mxu0 %v1605
    %1773 = vmatprep.subr.bf16.mxu0 0
    %1774 = vmatpush2.bf16.msra.mxu0 0
    %1775 = vmatprep.subr.bf16.mxu0 0
    %1776 = vmatpush2.bf16.msra.mxu0 0
    %1777 = vmatprep.subr.bf16.mxu0 0
    %1778 = vmatpush2.bf16.msra.mxu0 0
    %1779 = vmatprep.subr.bf16.mxu0 0
    %1780 = vmatpush2.bf16.msra.mxu0 0
    %1781 = vmatprep.subr.bf16.mxu0 0
    %1782 = vmatpush2.bf16.msra.mxu0 0
    %1783 = vmatprep.subr.bf16.mxu0 0
    %1784 = vmatpush2.bf16.msra.mxu0 0
    %1785 = vmatprep.subr.bf16.mxu0 0
    %1786 = vmatpush2.bf16.msra.mxu0 0
    %1787 = vmatprep.subr.bf16.mxu0 0
    %1788 = vmatpush2.bf16.msra.mxu0 0
    %1789 = vmatprep.mubr.bf16.mxu0 0
    %1790 = vmatmul.mubr.bf16.gmra.mxu0 %v1632
    %v1791 = vpop.f32.mrf.mxu0
    %v1792 = vadd.f32 %v1546, %v1791
    %v1793 = vpop.f32.mrf.mxu0
    %v1794 = vadd.f32 %v1550, %v1793
    %v1795 = vpop.f32.mrf.mxu0
    %v1796 = vpop.f32.mrf.mxu0
    %1797 = vdwg.mxu0
    %v1798 = vmax.f32 %v1669, 0.0
    %v1799 = vmax.f32 %v1671, 0.0
    %v1800 = vmax.f32 %v1710, 0.0
    %v1801 = vmax.f32 %v1712, 0.0
    %v1802 = vmax.f32 %v1751, 0.0
    %v1803 = vmax.f32 %v1753, 0.0
    %v1804 = vmax.f32 %v1792, 0.0
    %v1805 = vmax.f32 %v1794, 0.0
    %v1806 = vpack.c.bf16 %v1798, %v1798
    %v1807 = vpack.c.bf16 %v1799, %v1799
    %v1808 = vpack.c.bf16 %v1800, %v1800
    %v1809 = vpack.c.bf16 %v1801, %v1801
    %v1810 = vpack.c.bf16 %v1802, %v1802
    %v1811 = vpack.c.bf16 %v1803, %v1803
    %v1812 = vpack.c.bf16 %v1804, %v1804
    %v1813 = vpack.c.bf16 %v1805, %v1805
    %v1814 = vld [vmem:[#allocation2] sm:$0xf]
    %v1815 = vld [vmem:[#allocation2 + $0x4] sm:$0xf]
    %v1816 = vld [vmem:[#allocation2 + $0x8] sm:$0xf]
    %v1817 = vld [vmem:[#allocation2 + $0xc] sm:$0xf]
    %v1818 = vld [vmem:[#allocation2 + $0x10] sm:$0xf]
    %v1819 = vld [vmem:[#allocation2 + $0x14] sm:$0xf]
    %v1820 = vld [vmem:[#allocation2 + $0x18] sm:$0xf]
    %v1821 = vld [vmem:[#allocation2 + $0x1c] sm:$0xf]
    %v1822 = vld [vmem:[#allocation2 + $0x20] sm:$0xf]
    %v1823 = vld [vmem:[#allocation2 + $0x24] sm:$0xf]
    %v1824 = vld [vmem:[#allocation2 + $0x28] sm:$0xf]
    %v1825 = vld [vmem:[#allocation2 + $0x2c] sm:$0xf]
    %v1826 = vld [vmem:[#allocation2 + $0x30] sm:$0xf]
    %v1827 = vld [vmem:[#allocation2 + $0x34] sm:$0xf]
    %v1828 = vld [vmem:[#allocation2 + $0x38] sm:$0xf]
    %v1829 = vld [vmem:[#allocation2 + $0x3c] sm:$0xf]
    %v1830 = vld [vmem:[#allocation2 + $0x40] sm:$0xf]
    %v1831 = vld [vmem:[#allocation2 + $0x44] sm:$0xf]
    %v1832 = vld [vmem:[#allocation2 + $0x48] sm:$0xf]
    %v1833 = vld [vmem:[#allocation2 + $0x4c] sm:$0xf]
    %v1834 = vld [vmem:[#allocation2 + $0x50] sm:$0xf]
    %v1835 = vld [vmem:[#allocation2 + $0x54] sm:$0xf]
    %v1836 = vld [vmem:[#allocation2 + $0x58] sm:$0xf]
    %v1837 = vld [vmem:[#allocation2 + $0x5c] sm:$0xf]
    %v1838 = vld [vmem:[#allocation2 + $0x60] sm:$0xf]
    %v1839 = vld [vmem:[#allocation2 + $0x64] sm:$0xf]
    %v1840 = vld [vmem:[#allocation2 + $0x68] sm:$0xf]
    %v1841 = vld [vmem:[#allocation2 + $0x6c] sm:$0xf]
    %v1842 = vld [vmem:[#allocation2 + $0x70] sm:$0xf]
    %v1843 = vld [vmem:[#allocation2 + $0x74] sm:$0xf]
    %v1844 = vld [vmem:[#allocation2 + $0x78] sm:$0xf]
    %v1845 = vld [vmem:[#allocation2 + $0x7c] sm:$0xf]
    %v1846 = vld [vmem:[#allocation2 + $0x80] sm:$0xf]
    %v1847 = vld [vmem:[#allocation2 + $0x84] sm:$0xf]
    %v1848 = vld [vmem:[#allocation2 + $0x88] sm:$0xf]
    %v1849 = vld [vmem:[#allocation2 + $0x8c] sm:$0xf]
    %v1850 = vld [vmem:[#allocation2 + $0x90] sm:$0xf]
    %v1851 = vld [vmem:[#allocation2 + $0x94] sm:$0xf]
    %v1852 = vld [vmem:[#allocation2 + $0x98] sm:$0xf]
    %v1853 = vld [vmem:[#allocation2 + $0x9c] sm:$0xf]
    %v1854 = vld [vmem:[#allocation2 + $0xa0] sm:$0xf]
    %v1855 = vld [vmem:[#allocation2 + $0xa4] sm:$0xf]
    %v1856 = vld [vmem:[#allocation2 + $0xa8] sm:$0xf]
    %v1857 = vld [vmem:[#allocation2 + $0xac] sm:$0xf]
    %v1858 = vld [vmem:[#allocation2 + $0xb0] sm:$0xf]
    %v1859 = vld [vmem:[#allocation2 + $0xb4] sm:$0xf]
    %v1860 = vld [vmem:[#allocation2 + $0xb8] sm:$0xf]
    %v1861 = vld [vmem:[#allocation2 + $0xbc] sm:$0xf]
    %v1862 = vld [vmem:[#allocation2 + $0xc0] sm:$0xf]
    %v1863 = vld [vmem:[#allocation2 + $0xc4] sm:$0xf]
    %v1864 = vld [vmem:[#allocation2 + $0xc8] sm:$0xf]
    %v1865 = vld [vmem:[#allocation2 + $0xcc] sm:$0xf]
    %v1866 = vld [vmem:[#allocation2 + $0xd0] sm:$0xf]
    %v1867 = vld [vmem:[#allocation2 + $0xd4] sm:$0xf]
    %v1868 = vld [vmem:[#allocation2 + $0xd8] sm:$0xf]
    %v1869 = vld [vmem:[#allocation2 + $0xdc] sm:$0xf]
    %v1870 = vld [vmem:[#allocation2 + $0xe0] sm:$0xf]
    %v1871 = vld [vmem:[#allocation2 + $0xe4] sm:$0xf]
    %v1872 = vld [vmem:[#allocation2 + $0xe8] sm:$0xf]
    %v1873 = vld [vmem:[#allocation2 + $0xec] sm:$0xf]
    %v1874 = vld [vmem:[#allocation2 + $0xf0] sm:$0xf]
    %v1875 = vld [vmem:[#allocation2 + $0xf4] sm:$0xf]
    %v1876 = vld [vmem:[#allocation2 + $0xf8] sm:$0xf]
    %v1877 = vld [vmem:[#allocation2 + $0xfc] sm:$0xf]
    %v1878 = vld [vmem:[#allocation2 + $0x100] sm:$0xf]
    %v1879 = vld [vmem:[#allocation2 + $0x104] sm:$0xf]
    %v1880 = vld [vmem:[#allocation2 + $0x108] sm:$0xf]
    %v1881 = vld [vmem:[#allocation2 + $0x10c] sm:$0xf]
    %v1882 = vld [vmem:[#allocation2 + $0x110] sm:$0xf]
    %v1883 = vld [vmem:[#allocation2 + $0x114] sm:$0xf]
    %v1884 = vld [vmem:[#allocation2 + $0x118] sm:$0xf]
    %v1885 = vld [vmem:[#allocation2 + $0x11c] sm:$0xf]
    %v1886 = vld [vmem:[#allocation2 + $0x120] sm:$0xf]
    %v1887 = vld [vmem:[#allocation2 + $0x124] sm:$0xf]
    %v1888 = vld [vmem:[#allocation2 + $0x128] sm:$0xf]
    %v1889 = vld [vmem:[#allocation2 + $0x12c] sm:$0xf]
    %v1890 = vld [vmem:[#allocation2 + $0x130] sm:$0xf]
    %v1891 = vld [vmem:[#allocation2 + $0x134] sm:$0xf]
    %v1892 = vld [vmem:[#allocation2 + $0x138] sm:$0xf]
    %v1893 = vld [vmem:[#allocation2 + $0x13c] sm:$0xf]
    %v1894 = vld [vmem:[#allocation2 + $0x140] sm:$0xf]
    %v1895 = vld [vmem:[#allocation2 + $0x144] sm:$0xf]
    %v1896 = vld [vmem:[#allocation2 + $0x148] sm:$0xf]
    %v1897 = vld [vmem:[#allocation2 + $0x14c] sm:$0xf]
    %v1898 = vld [vmem:[#allocation2 + $0x150] sm:$0xf]
    %v1899 = vld [vmem:[#allocation2 + $0x154] sm:$0xf]
    %v1900 = vld [vmem:[#allocation2 + $0x158] sm:$0xf]
    %v1901 = vld [vmem:[#allocation2 + $0x15c] sm:$0xf]
    %v1902 = vld [vmem:[#allocation2 + $0x160] sm:$0xf]
    %v1903 = vld [vmem:[#allocation2 + $0x164] sm:$0xf]
    %v1904 = vld [vmem:[#allocation2 + $0x168] sm:$0xf]
    %v1905 = vld [vmem:[#allocation2 + $0x16c] sm:$0xf]
    %v1906 = vld [vmem:[#allocation2 + $0x170] sm:$0xf]
    %v1907 = vld [vmem:[#allocation2 + $0x174] sm:$0xf]
    %v1908 = vld [vmem:[#allocation2 + $0x178] sm:$0xf]
    %v1909 = vld [vmem:[#allocation2 + $0x17c] sm:$0xf]
    %v1910 = vld [vmem:[#allocation2 + $0x180] sm:$0xf]
    %v1911 = vld [vmem:[#allocation2 + $0x184] sm:$0xf]
    %v1912 = vld [vmem:[#allocation2 + $0x188] sm:$0xf]
    %v1913 = vld [vmem:[#allocation2 + $0x18c] sm:$0xf]
    %v1914 = vld [vmem:[#allocation2 + $0x190] sm:$0xf]
    %v1915 = vld [vmem:[#allocation2 + $0x194] sm:$0xf]
    %v1916 = vld [vmem:[#allocation2 + $0x198] sm:$0xf]
    %v1917 = vld [vmem:[#allocation2 + $0x19c] sm:$0xf]
    %v1918 = vld [vmem:[#allocation2 + $0x1a0] sm:$0xf]
    %v1919 = vld [vmem:[#allocation2 + $0x1a4] sm:$0xf]
    %v1920 = vld [vmem:[#allocation2 + $0x1a8] sm:$0xf]
    %v1921 = vld [vmem:[#allocation2 + $0x1ac] sm:$0xf]
    %v1922 = vld [vmem:[#allocation2 + $0x1b0] sm:$0xf]
    %v1923 = vld [vmem:[#allocation2 + $0x1b4] sm:$0xf]
    %v1924 = vld [vmem:[#allocation2 + $0x1b8] sm:$0xf]
    %v1925 = vld [vmem:[#allocation2 + $0x1bc] sm:$0xf]
    %v1926 = vld [vmem:[#allocation2 + $0x1c0] sm:$0xf]
    %v1927 = vld [vmem:[#allocation2 + $0x1c4] sm:$0xf]
    %v1928 = vld [vmem:[#allocation2 + $0x1c8] sm:$0xf]
    %v1929 = vld [vmem:[#allocation2 + $0x1cc] sm:$0xf]
    %v1930 = vld [vmem:[#allocation2 + $0x1d0] sm:$0xf]
    %v1931 = vld [vmem:[#allocation2 + $0x1d4] sm:$0xf]
    %v1932 = vld [vmem:[#allocation2 + $0x1d8] sm:$0xf]
    %v1933 = vld [vmem:[#allocation2 + $0x1dc] sm:$0xf]
    %v1934 = vld [vmem:[#allocation2 + $0x1e0] sm:$0xf]
    %v1935 = vld [vmem:[#allocation2 + $0x1e4] sm:$0xf]
    %v1936 = vld [vmem:[#allocation2 + $0x1e8] sm:$0xf]
    %v1937 = vld [vmem:[#allocation2 + $0x1ec] sm:$0xf]
    %v1938 = vld [vmem:[#allocation2 + $0x1f0] sm:$0xf]
    %v1939 = vld [vmem:[#allocation2 + $0x1f4] sm:$0xf]
    %v1940 = vld [vmem:[#allocation2 + $0x1f8] sm:$0xf]
    %v1941 = vld [vmem:[#allocation2 + $0x1fc] sm:$0xf]
    %v1942 = vlaneseq
    %v1943 = vshrl.u32 %v1942, 7
    %v1944 = vsub.s32 1, %v1943
    %v1945 = vrot.slane %v1458, %v1944
    %v2074 = vunpack.c.l.b16 %v1814
    %v2075 = vunpack.c.l.b16 %v1815
    %v2076 = vunpack.c.l.b16 %v1816
    %v2077 = vunpack.c.l.b16 %v1817
    %v2078 = vunpack.c.l.b16 %v1818
    %v2079 = vunpack.c.l.b16 %v1819
    %v2080 = vunpack.c.l.b16 %v1820
    %v2081 = vunpack.c.l.b16 %v1821
    %v2082 = vunpack.c.l.b16 %v1822
    %v2083 = vunpack.c.l.b16 %v1823
    %v2084 = vunpack.c.l.b16 %v1824
    %v2085 = vunpack.c.l.b16 %v1825
    %v2086 = vunpack.c.l.b16 %v1826
    %v2087 = vunpack.c.l.b16 %v1827
    %v2088 = vunpack.c.l.b16 %v1828
    %v2089 = vunpack.c.l.b16 %v1829
    %v2090 = vunpack.c.l.b16 %v1830
    %v2091 = vunpack.c.l.b16 %v1831
    %v2092 = vunpack.c.l.b16 %v1832
    %v2093 = vunpack.c.l.b16 %v1833
    %v2094 = vunpack.c.l.b16 %v1834
    %v2095 = vunpack.c.l.b16 %v1835
    %v2096 = vunpack.c.l.b16 %v1836
    %v2097 = vunpack.c.l.b16 %v1837
    %v2098 = vunpack.c.l.b16 %v1838
    %v2099 = vunpack.c.l.b16 %v1839
    %v2100 = vunpack.c.l.b16 %v1840
    %v2101 = vunpack.c.l.b16 %v1841
    %v2102 = vunpack.c.l.b16 %v1842
    %v2103 = vunpack.c.l.b16 %v1843
    %v2104 = vunpack.c.l.b16 %v1844
    %v2105 = vunpack.c.l.b16 %v1845
    %v2106 = vunpack.c.l.b16 %v1846
    %v2107 = vunpack.c.l.b16 %v1847
    %v2108 = vunpack.c.l.b16 %v1848
    %v2109 = vunpack.c.l.b16 %v1849
    %v2110 = vunpack.c.l.b16 %v1850
    %v2111 = vunpack.c.l.b16 %v1851
    %v2112 = vunpack.c.l.b16 %v1852
    %v2113 = vunpack.c.l.b16 %v1853
    %v2114 = vunpack.c.l.b16 %v1854
    %v2115 = vunpack.c.l.b16 %v1855
    %v2116 = vunpack.c.l.b16 %v1856
    %v2117 = vunpack.c.l.b16 %v1857
    %v2118 = vunpack.c.l.b16 %v1858
    %v2119 = vunpack.c.l.b16 %v1859
    %v2120 = vunpack.c.l.b16 %v1860
    %v2121 = vunpack.c.l.b16 %v1861
    %v2122 = vunpack.c.l.b16 %v1862
    %v2123 = vunpack.c.l.b16 %v1863
    %v2124 = vunpack.c.l.b16 %v1864
    %v2125 = vunpack.c.l.b16 %v1865
    %v2126 = vunpack.c.l.b16 %v1866
    %v2127 = vunpack.c.l.b16 %v1867
    %v2128 = vunpack.c.l.b16 %v1868
    %v2129 = vunpack.c.l.b16 %v1869
    %v2130 = vunpack.c.l.b16 %v1870
    %v2131 = vunpack.c.l.b16 %v1871
    %v2132 = vunpack.c.l.b16 %v1872
    %v2133 = vunpack.c.l.b16 %v1873
    %v2134 = vunpack.c.l.b16 %v1874
    %v2135 = vunpack.c.l.b16 %v1875
    %v2136 = vunpack.c.l.b16 %v1876
    %v2137 = vunpack.c.l.b16 %v1877
    %v2138 = vunpack.c.l.b16 %v1878
    %v2139 = vunpack.c.l.b16 %v1879
    %v2140 = vunpack.c.l.b16 %v1880
    %v2141 = vunpack.c.l.b16 %v1881
    %v2142 = vunpack.c.l.b16 %v1882
    %v2143 = vunpack.c.l.b16 %v1883
    %v2144 = vunpack.c.l.b16 %v1884
    %v2145 = vunpack.c.l.b16 %v1885
    %v2146 = vunpack.c.l.b16 %v1886
    %v2147 = vunpack.c.l.b16 %v1887
    %v2148 = vunpack.c.l.b16 %v1888
    %v2149 = vunpack.c.l.b16 %v1889
    %v2150 = vunpack.c.l.b16 %v1890
    %v2151 = vunpack.c.l.b16 %v1891
    %v2152 = vunpack.c.l.b16 %v1892
    %v2153 = vunpack.c.l.b16 %v1893
    %v2154 = vunpack.c.l.b16 %v1894
    %v2155 = vunpack.c.l.b16 %v1895
    %v2156 = vunpack.c.l.b16 %v1896
    %v2157 = vunpack.c.l.b16 %v1897
    %v2158 = vunpack.c.l.b16 %v1898
    %v2159 = vunpack.c.l.b16 %v1899
    %v2160 = vunpack.c.l.b16 %v1900
    %v2161 = vunpack.c.l.b16 %v1901
    %v2162 = vunpack.c.l.b16 %v1902
    %v2163 = vunpack.c.l.b16 %v1903
    %v2164 = vunpack.c.l.b16 %v1904
    %v2165 = vunpack.c.l.b16 %v1905
    %v2166 = vunpack.c.l.b16 %v1906
    %v2167 = vunpack.c.l.b16 %v1907
    %v2168 = vunpack.c.l.b16 %v1908
    %v2169 = vunpack.c.l.b16 %v1909
    %v2170 = vunpack.c.l.b16 %v1910
    %v2171 = vunpack.c.l.b16 %v1911
    %v2172 = vunpack.c.l.b16 %v1912
    %v2173 = vunpack.c.l.b16 %v1913
    %v2174 = vunpack.c.l.b16 %v1914
    %v2175 = vunpack.c.l.b16 %v1915
    %v2176 = vunpack.c.l.b16 %v1916
    %v2177 = vunpack.c.l.b16 %v1917
    %v2178 = vunpack.c.l.b16 %v1918
    %v2179 = vunpack.c.l.b16 %v1919
    %v2180 = vunpack.c.l.b16 %v1920
    %v2181 = vunpack.c.l.b16 %v1921
    %v2182 = vunpack.c.l.b16 %v1922
    %v2183 = vunpack.c.l.b16 %v1923
    %v2184 = vunpack.c.l.b16 %v1924
    %v2185 = vunpack.c.l.b16 %v1925
    %v2186 = vunpack.c.l.b16 %v1926
    %v2187 = vunpack.c.l.b16 %v1927
    %v2188 = vunpack.c.l.b16 %v1928
    %v2189 = vunpack.c.l.b16 %v1929
    %v2190 = vunpack.c.l.b16 %v1930
    %v2191 = vunpack.c.l.b16 %v1931
    %v2192 = vunpack.c.l.b16 %v1932
    %v2193 = vunpack.c.l.b16 %v1933
    %v2194 = vunpack.c.l.b16 %v1934
    %v2195 = vunpack.c.l.b16 %v1935
    %v2196 = vunpack.c.l.b16 %v1936
    %v2197 = vunpack.c.l.b16 %v1937
    %v2198 = vunpack.c.l.b16 %v1938
    %v2199 = vunpack.c.l.b16 %v1939
    %v2200 = vunpack.c.l.b16 %v1940
    %v2201 = vunpack.c.l.b16 %v1941
    %v2202 = vpack.c.b16 %v2075, %v2074
    %v2203 = vpack.c.b16 %v2077, %v2076
    %v2204 = vpack.c.b16 %v2079, %v2078
    %v2205 = vpack.c.b16 %v2081, %v2080
    %v2206 = vpack.c.b16 %v2083, %v2082
    %v2207 = vpack.c.b16 %v2085, %v2084
    %v2208 = vpack.c.b16 %v2087, %v2086
    %v2209 = vpack.c.b16 %v2089, %v2088
    %v2210 = vpack.c.b16 %v2091, %v2090
    %v2211 = vpack.c.b16 %v2093, %v2092
    %v2212 = vpack.c.b16 %v2095, %v2094
    %v2213 = vpack.c.b16 %v2097, %v2096
    %v2214 = vpack.c.b16 %v2099, %v2098
    %v2215 = vpack.c.b16 %v2101, %v2100
    %v2216 = vpack.c.b16 %v2103, %v2102
    %v2217 = vpack.c.b16 %v2105, %v2104
    %v2218 = vpack.c.b16 %v2107, %v2106
    %v2219 = vpack.c.b16 %v2109, %v2108
    %v2220 = vpack.c.b16 %v2111, %v2110
    %v2221 = vpack.c.b16 %v2113, %v2112
    %v2222 = vpack.c.b16 %v2115, %v2114
    %v2223 = vpack.c.b16 %v2117, %v2116
    %v2224 = vpack.c.b16 %v2119, %v2118
    %v2225 = vpack.c.b16 %v2121, %v2120
    %v2226 = vpack.c.b16 %v2123, %v2122
    %v2227 = vpack.c.b16 %v2125, %v2124
    %v2228 = vpack.c.b16 %v2127, %v2126
    %v2229 = vpack.c.b16 %v2129, %v2128
    %v2230 = vpack.c.b16 %v2131, %v2130
    %v2231 = vpack.c.b16 %v2133, %v2132
    %v2232 = vpack.c.b16 %v2135, %v2134
    %v2233 = vpack.c.b16 %v2137, %v2136
    %v2234 = vpack.c.b16 %v2139, %v2138
    %v2235 = vpack.c.b16 %v2141, %v2140
    %v2236 = vpack.c.b16 %v2143, %v2142
    %v2237 = vpack.c.b16 %v2145, %v2144
    %v2238 = vpack.c.b16 %v2147, %v2146
    %v2239 = vpack.c.b16 %v2149, %v2148
    %v2240 = vpack.c.b16 %v2151, %v2150
    %v2241 = vpack.c.b16 %v2153, %v2152
    %v2242 = vpack.c.b16 %v2155, %v2154
    %v2243 = vpack.c.b16 %v2157, %v2156
    %v2244 = vpack.c.b16 %v2159, %v2158
    %v2245 = vpack.c.b16 %v2161, %v2160
    %v2246 = vpack.c.b16 %v2163, %v2162
    %v2247 = vpack.c.b16 %v2165, %v2164
    %v2248 = vpack.c.b16 %v2167, %v2166
    %v2249 = vpack.c.b16 %v2169, %v2168
    %v2250 = vpack.c.b16 %v2171, %v2170
    %v2251 = vpack.c.b16 %v2173, %v2172
    %v2252 = vpack.c.b16 %v2175, %v2174
    %v2253 = vpack.c.b16 %v2177, %v2176
    %v2254 = vpack.c.b16 %v2179, %v2178
    %v2255 = vpack.c.b16 %v2181, %v2180
    %v2256 = vpack.c.b16 %v2183, %v2182
    %v2257 = vpack.c.b16 %v2185, %v2184
    %v2258 = vpack.c.b16 %v2187, %v2186
    %v2259 = vpack.c.b16 %v2189, %v2188
    %v2260 = vpack.c.b16 %v2191, %v2190
    %v2261 = vpack.c.b16 %v2193, %v2192
    %v2262 = vpack.c.b16 %v2195, %v2194
    %v2263 = vpack.c.b16 %v2197, %v2196
    %v2264 = vpack.c.b16 %v2199, %v2198
    %v2265 = vpack.c.b16 %v2201, %v2200
    %2330 = vmatprep.subr.bf16.mxu0 0
    %2331 = vmatpush1.bf16.msra.mxu0 %v2209
    %2332 = vmatprep.subr.bf16.mxu0 0
    %2333 = vmatpush1.bf16.msra.mxu0 %v2208
    %2334 = vmatprep.subr.bf16.mxu0 0
    %2335 = vmatpush1.bf16.msra.mxu0 %v2207
    %2336 = vmatprep.subr.bf16.mxu0 0
    %2337 = vmatpush1.bf16.msra.mxu0 %v2206
    %2338 = vmatprep.subr.bf16.mxu0 0
    %2339 = vmatpush1.bf16.msra.mxu0 %v2205
    %2340 = vmatprep.subr.bf16.mxu0 0
    %2341 = vmatpush1.bf16.msra.mxu0 %v2204
    %2342 = vmatprep.subr.bf16.mxu0 0
    %2343 = vmatpush1.bf16.msra.mxu0 %v2203
    %2344 = vmatprep.subr.bf16.mxu0 0
    %2345 = vmatpush1.bf16.msra.mxu0 %v2202
    %2346 = vmatprep.subr.bf16.mxu0 0
    %2347 = vmatpush2.bf16.msra.mxu0 %v2217
    %2348 = vmatprep.subr.bf16.mxu0 0
    %2349 = vmatpush2.bf16.msra.mxu0 %v2216
    %2350 = vmatprep.subr.bf16.mxu0 0
    %2351 = vmatpush2.bf16.msra.mxu0 %v2215
    %2352 = vmatprep.subr.bf16.mxu0 0
    %2353 = vmatpush2.bf16.msra.mxu0 %v2214
    %2354 = vmatprep.subr.bf16.mxu0 0
    %2355 = vmatpush2.bf16.msra.mxu0 %v2213
    %2356 = vmatprep.subr.bf16.mxu0 0
    %2357 = vmatpush2.bf16.msra.mxu0 %v2212
    %2358 = vmatprep.subr.bf16.mxu0 0
    %2359 = vmatpush2.bf16.msra.mxu0 %v2211
    %2360 = vmatprep.subr.bf16.mxu0 0
    %2361 = vmatpush2.bf16.msra.mxu0 %v2210
    %2362 = vmatprep.mubr.bf16.mxu0 %v1807
    %2363 = vmatmul.mubr.bf16.gmra.mxu0 %v1806
    %v2364 = vpop.f32.mrf.mxu0
    %v2365 = vadd.f32 %v1945, %v2364
    %v2366 = vpop.f32.mrf.mxu0
    %v2367 = vpop.f32.mrf.mxu0
    %v2368 = vpop.f32.mrf.mxu0
    %2369 = vdwg.mxu0
    %2370 = vmatprep.subr.bf16.mxu0 0
    %2371 = vmatpush1.bf16.msra.mxu0 %v2225
    %2372 = vmatprep.subr.bf16.mxu0 0
    %2373 = vmatpush1.bf16.msra.mxu0 %v2224
    %2374 = vmatprep.subr.bf16.mxu0 0
    %2375 = vmatpush1.bf16.msra.mxu0 %v2223
    %2376 = vmatprep.subr.bf16.mxu0 0
    %2377 = vmatpush1.bf16.msra.mxu0 %v2222
    %2378 = vmatprep.subr.bf16.mxu0 0
    %2379 = vmatpush1.bf16.msra.mxu0 %v2221
    %2380 = vmatprep.subr.bf16.mxu0 0
    %2381 = vmatpush1.bf16.msra.mxu0 %v2220
    %2382 = vmatprep.subr.bf16.mxu0 0
    %2383 = vmatpush1.bf16.msra.mxu0 %v2219
    %2384 = vmatprep.subr.bf16.mxu0 0
    %2385 = vmatpush1.bf16.msra.mxu0 %v2218
    %2386 = vmatprep.subr.bf16.mxu0 0
    %2387 = vmatpush2.bf16.msra.mxu0 %v2233
    %2388 = vmatprep.subr.bf16.mxu0 0
    %2389 = vmatpush2.bf16.msra.mxu0 %v2232
    %2390 = vmatprep.subr.bf16.mxu0 0
    %2391 = vmatpush2.bf16.msra.mxu0 %v2231
    %2392 = vmatprep.subr.bf16.mxu0 0
    %2393 = vmatpush2.bf16.msra.mxu0 %v2230
    %2394 = vmatprep.subr.bf16.mxu0 0
    %2395 = vmatpush2.bf16.msra.mxu0 %v2229
    %2396 = vmatprep.subr.bf16.mxu0 0
    %2397 = vmatpush2.bf16.msra.mxu0 %v2228
    %2398 = vmatprep.subr.bf16.mxu0 0
    %2399 = vmatpush2.bf16.msra.mxu0 %v2227
    %2400 = vmatprep.subr.bf16.mxu0 0
    %2401 = vmatpush2.bf16.msra.mxu0 %v2226
    %2402 = vmatprep.mubr.bf16.mxu0 %v1809
    %2403 = vmatmul.mubr.bf16.gmra.mxu0 %v1808
    %v2404 = vpop.f32.mrf.mxu0
    %v2405 = vadd.f32 %v2365, %v2404
    %v2406 = vpop.f32.mrf.mxu0
    %v2407 = vpop.f32.mrf.mxu0
    %v2408 = vpop.f32.mrf.mxu0
    %2409 = vdwg.mxu0
    %2410 = vmatprep.subr.bf16.mxu0 0
    %2411 = vmatpush1.bf16.msra.mxu0 %v2241
    %2412 = vmatprep.subr.bf16.mxu0 0
    %2413 = vmatpush1.bf16.msra.mxu0 %v2240
    %2414 = vmatprep.subr.bf16.mxu0 0
    %2415 = vmatpush1.bf16.msra.mxu0 %v2239
    %2416 = vmatprep.subr.bf16.mxu0 0
    %2417 = vmatpush1.bf16.msra.mxu0 %v2238
    %2418 = vmatprep.subr.bf16.mxu0 0
    %2419 = vmatpush1.bf16.msra.mxu0 %v2237
    %2420 = vmatprep.subr.bf16.mxu0 0
    %2421 = vmatpush1.bf16.msra.mxu0 %v2236
    %2422 = vmatprep.subr.bf16.mxu0 0
    %2423 = vmatpush1.bf16.msra.mxu0 %v2235
    %2424 = vmatprep.subr.bf16.mxu0 0
    %2425 = vmatpush1.bf16.msra.mxu0 %v2234
    %2426 = vmatprep.subr.bf16.mxu0 0
    %2427 = vmatpush2.bf16.msra.mxu0 %v2249
    %2428 = vmatprep.subr.bf16.mxu0 0
    %2429 = vmatpush2.bf16.msra.mxu0 %v2248
    %2430 = vmatprep.subr.bf16.mxu0 0
    %2431 = vmatpush2.bf16.msra.mxu0 %v2247
    %2432 = vmatprep.subr.bf16.mxu0 0
    %2433 = vmatpush2.bf16.msra.mxu0 %v2246
    %2434 = vmatprep.subr.bf16.mxu0 0
    %2435 = vmatpush2.bf16.msra.mxu0 %v2245
    %2436 = vmatprep.subr.bf16.mxu0 0
    %2437 = vmatpush2.bf16.msra.mxu0 %v2244
    %2438 = vmatprep.subr.bf16.mxu0 0
    %2439 = vmatpush2.bf16.msra.mxu0 %v2243
    %2440 = vmatprep.subr.bf16.mxu0 0
    %2441 = vmatpush2.bf16.msra.mxu0 %v2242
    %2442 = vmatprep.mubr.bf16.mxu0 %v1811
    %2443 = vmatmul.mubr.bf16.gmra.mxu0 %v1810
    %v2444 = vpop.f32.mrf.mxu0
    %v2445 = vadd.f32 %v2405, %v2444
    %v2446 = vpop.f32.mrf.mxu0
    %v2447 = vpop.f32.mrf.mxu0
    %v2448 = vpop.f32.mrf.mxu0
    %2449 = vdwg.mxu0
    %2450 = vmatprep.subr.bf16.mxu0 0
    %2451 = vmatpush1.bf16.msra.mxu0 %v2257
    %2452 = vmatprep.subr.bf16.mxu0 0
    %2453 = vmatpush1.bf16.msra.mxu0 %v2256
    %2454 = vmatprep.subr.bf16.mxu0 0
    %2455 = vmatpush1.bf16.msra.mxu0 %v2255
    %2456 = vmatprep.subr.bf16.mxu0 0
    %2457 = vmatpush1.bf16.msra.mxu0 %v2254
    %2458 = vmatprep.subr.bf16.mxu0 0
    %2459 = vmatpush1.bf16.msra.mxu0 %v2253
    %2460 = vmatprep.subr.bf16.mxu0 0
    %2461 = vmatpush1.bf16.msra.mxu0 %v2252
    %2462 = vmatprep.subr.bf16.mxu0 0
    %2463 = vmatpush1.bf16.msra.mxu0 %v2251
    %2464 = vmatprep.subr.bf16.mxu0 0
    %2465 = vmatpush1.bf16.msra.mxu0 %v2250
    %2466 = vmatprep.subr.bf16.mxu0 0
    %2467 = vmatpush2.bf16.msra.mxu0 %v2265
    %2468 = vmatprep.subr.bf16.mxu0 0
    %2469 = vmatpush2.bf16.msra.mxu0 %v2264
    %2470 = vmatprep.subr.bf16.mxu0 0
    %2471 = vmatpush2.bf16.msra.mxu0 %v2263
    %2472 = vmatprep.subr.bf16.mxu0 0
    %2473 = vmatpush2.bf16.msra.mxu0 %v2262
    %2474 = vmatprep.subr.bf16.mxu0 0
    %2475 = vmatpush2.bf16.msra.mxu0 %v2261
    %2476 = vmatprep.subr.bf16.mxu0 0
    %2477 = vmatpush2.bf16.msra.mxu0 %v2260
    %2478 = vmatprep.subr.bf16.mxu0 0
    %2479 = vmatpush2.bf16.msra.mxu0 %v2259
    %2480 = vmatprep.subr.bf16.mxu0 0
    %2481 = vmatpush2.bf16.msra.mxu0 %v2258
    %2482 = vmatprep.mubr.bf16.mxu0 %v1813
    %2483 = vmatmul.mubr.bf16.gmra.mxu0 %v1812
    %v2484 = vpop.f32.mrf.mxu0
    %v2485 = vadd.f32 %v2445, %v2484
    %v2486 = vpop.f32.mrf.mxu0
    %v2487 = vpop.f32.mrf.mxu0
    %v2488 = vpop.f32.mrf.mxu0
    %2489 = vdwg.mxu0
    %2490 = vst [vmem:[#allocation5] sm:$0xff] %v2485
    // Predicated region
    $region38: #{tpu_custom_call.1} parent=1 // pred_check
      _
    $region39: #{tpu_custom_call.1} parent=1 // pred_check_branch
      %2492 = sbr.rel (0) target = $region41
    $region40: #{tpu_custom_call.1} parent=1 // pred_region
      %s2494 = ssub.s32 128, 128
      %2495 = vsyncadd [#allocation4], %s2494
      %s2497 = sshll.u32 [#allocation5], 4
      %s2498 = int_to_ptr.vmem [resolvable:$true] %s2497
      %2500 = dma.vmem_to_hbm [thread:$0]  %s2498, 128, %s8, [#allocation4]
    $region41: #{tpu_custom_call.1} parent=1 // pred_fallthru
      _
    // Predicated region
    $region42: #{tpu_custom_call.1} parent=1 // pred_check
      _
    $region43: #{tpu_custom_call.1} parent=1 // pred_check_branch
      %2502 = sbr.rel (0) target = $region45
    $region44: #{tpu_custom_call.1} parent=1 // pred_region
      %2503 = dma.done [#allocation4], 128
    $region45: #{tpu_custom_call.1} parent=1 // pred_fallthru
      _
    %2504 = vsyncpa [#allocation3], 1
    %2505 = vsyncpa [#allocation4], 1

</llo_original>
